<compile_context>
chip_gen: v5e
topology: v5e:2x2
jax: 0.10.0
libtpu: 0.0.40
codegen_flags: <defaults>
</compile_context>

<pallas_src>
import numpy as np
import jax
import jax.numpy as jnp
from jax.experimental import pallas as pl
from jax.experimental.pallas import tpu as pltpu

S = 1e-05
BLOCK = 8


def _dct_matrix(n=BLOCK):
    C = np.zeros((n, n), dtype=np.float64)
    for k in range(n):
        for m in range(n):
            if k == 0:
                C[k, m] = np.sqrt(1.0 / n)
            else:
                C[k, m] = np.sqrt(2.0 / n) * np.cos(np.pi * k * (2 * m + 1) / (2 * n))
    return C


_D8_NP = _dct_matrix().astype(np.float32)  # [8, 8] orthonormal DCT-II matrix C


def _pick_tiles(batch, h, w, max_tr=256, min_steps=8):
    """Choose (row_tile, col_tile) for the natural-layout kernel.

    col tile: 128 keeps output stores lane-dense and the column-stage matmul
    minimal; fall back to the full width otherwise (full-dim blocks are always
    legal for the (8,128) BlockSpec rule).
    row tile: largest multiple of 8 dividing H such that the grid still has
    >= min_steps steps (pipelining + megacore split on v7x).
    """
    tc = 128 if (w % 128 == 0) else w  # TODO(synk): pad W to a 128 multiple for odd widths
    n_c = w // tc
    cands = [d for d in range(BLOCK, min(h, max_tr) + 1, BLOCK) if h % d == 0]
    if not cands:
        cands = [h]
    for d in sorted(cands, reverse=True):
        if batch * (h // d) * n_c >= min_steps:
            return d, tc
    return min(cands), tc  # tiny problem: maximize step count anyway


def _jpeg_kernel(cl_ref, cli_ref, cr_ref, cri_ref, q_ref, x_ref, o_ref, ycc_ref):
    # cl_ref  : [TR, TR]     kron(I, C)    row-DCT  left factor  (dct dtype, bf16 by default)
    # cli_ref : [TR, TR]     kron(I, C^T)  row-IDCT left factor
    # cr_ref  : [TC, TC]     kron(I, C^T)  col-DCT  right factor
    # cri_ref : [TC, TC]     kron(I, C)    col-IDCT right factor
    # q_ref   : [4, TR, TC]  f32 [q_lum/S, S/q_lum, q_chrom/S, S/q_chrom], 8x8-periodic tiled
    # x_ref   : [3, TR, TC]  f32 RGB tile in natural image layout
    # ycc_ref : [3*TR, TC]   f32 scratch (Y / Cb / Cr stacked along rows)
    TR = x_ref.shape[1]
    mxu_dt = cr_ref.dtype

    r = x_ref[0]
    g = x_ref[1]
    b = x_ref[2]

    # RGB -> YCbCr (the +128 on Cb/Cr must stay here: it feeds the DCT before round()).
    ycc_ref[0:TR]          = r * 0.299       + g * 0.587       + b * 0.114
    ycc_ref[TR:2 * TR]     = r * (-0.168736) + g * (-0.331264) + b * 0.5         + 128.0
    ycc_ref[2 * TR:3 * TR] = r * 0.5         + g * (-0.418688) + b * (-0.081312) + 128.0

    # Column-stage DCT for all three channels in a single MXU matmul (f32 accumulation).
    t1 = jnp.dot(ycc_ref[...].astype(mxu_dt), cr_ref[...],
                 preferred_element_type=jnp.float32)               # [3TR, TC]

    # Row-stage DCT + quantize / dequantize, per channel (left factor is per-channel).
    cl = cl_ref[...]
    for c in range(3):
        coef = jnp.dot(cl, t1[c * TR:(c + 1) * TR].astype(mxu_dt),
                       preferred_element_type=jnp.float32)          # [TR, TC]
        qtab, qinv = (q_ref[0], q_ref[1]) if c == 0 else (q_ref[2], q_ref[3])
        ycc_ref[c * TR:(c + 1) * TR] = jnp.round(coef * qinv) * qtab

    # Row-stage IDCT per channel (in place), then column-stage IDCT in one matmul.
    cli = cli_ref[...]
    for c in range(3):
        ycc_ref[c * TR:(c + 1) * TR] = jnp.dot(
            cli, ycc_ref[c * TR:(c + 1) * TR].astype(mxu_dt),
            preferred_element_type=jnp.float32)
    rec = jnp.dot(ycc_ref[...].astype(mxu_dt), cri_ref[...],
                  preferred_element_type=jnp.float32)               # [3TR, TC]

    y_rec  = rec[0:TR]
    cb_rec = rec[TR:2 * TR]        # still carries the +128 offset
    cr_rec = rec[2 * TR:3 * TR]

    # YCbCr -> RGB, constants copied verbatim from the module (incl. its quirks);
    # the -128 offsets are folded into the additive constants.
    o_ref[0] = jnp.clip(y_rec + cr_rec * 1.402 - (1.402 * 128.0), 0.0, 255.0)
    o_ref[1] = jnp.clip(y_rec + cb_rec * (-0.344136) + cr_rec * (-0.714136)
                        + ((0.344136 + 0.714136) * 128.0), 0.0, 255.0)
    o_ref[2] = jnp.clip(y_rec + cb_rec * 1.722 - (1.722 * 128.0), 0.0, 255.0)


class LearnableJPEGPallas:
    """JAX/Pallas port of LearnableJPEG (forward pass only)."""

    def __init__(self, image_shape, key, dct_dtype=jnp.bfloat16):
        self.image_shape = image_shape
        self.dct_dtype = dct_dtype       # jnp.float32 for a higher-precision parity path
        k1, k2 = jax.random.split(key)
        # nn.init.uniform_(q, a=10*S, b=100*S)
        self.q_luminance = jax.random.uniform(k1, (8, 8), jnp.float32, 10 * S, 100 * S)
        self.q_chrominance = jax.random.uniform(k2, (8, 8), jnp.float32, 10 * S, 100 * S)
        # jit once; constants below are built at trace time and cached per input shape.
        self._forward_jit = jax.jit(self._forward)

    def __call__(self, x):
        if x.ndim != 4 or x.shape[1] != 3:
            raise ValueError(f"Input tensor shape must be [B, 3, H, W], but got {x.shape}")
        if x.shape[2] % BLOCK != 0 or x.shape[3] % BLOCK != 0:
            raise ValueError(f"H and W must be multiples of {BLOCK}, got {x.shape}")
        return self._forward_jit(x, self.q_luminance, self.q_chrominance)

    def _forward(self, x, q_lum, q_chrom):
        B, C, H, W = x.shape
        TR, TC = _pick_tiles(B, H, W)
        nR, nC = H // TR, W // TC

        # Block-diagonal DCT factors for the natural layout (trace-time constants,
        # cached inside the jitted executable; bf16 operands for the MXU).
        cl  = jnp.asarray(np.kron(np.eye(TR // BLOCK, dtype=np.float32), _D8_NP),
                          dtype=self.dct_dtype)     # kron(I, C)
        cli = jnp.asarray(np.kron(np.eye(TR // BLOCK, dtype=np.float32), _D8_NP.T),
                          dtype=self.dct_dtype)     # kron(I, C^T)
        cr  = jnp.asarray(np.kron(np.eye(TC // BLOCK, dtype=np.float32), _D8_NP.T),
                          dtype=self.dct_dtype)     # kron(I, C^T)
        cri = jnp.asarray(np.kron(np.eye(TC // BLOCK, dtype=np.float32), _D8_NP),
                          dtype=self.dct_dtype)     # kron(I, C)

        # forward() clamps q to [1*S, 255*S]; the kernel quantizes with step q/S in [1, 255]
        # (exact reciprocal precomputed here), tiled 8x8-periodically to the natural layout.
        qy = jnp.clip(q_lum, 1.0 * S, 255.0 * S) / S
        qc = jnp.clip(q_chrom, 1.0 * S, 255.0 * S) / S
        qy_nat = jnp.tile(qy, (TR // BLOCK, TC // BLOCK))
        qc_nat = jnp.tile(qc, (TR // BLOCK, TC // BLOCK))
        q_all = jnp.stack([qy_nat, 1.0 / qy_nat, qc_nat, 1.0 / qc_nat], axis=0)  # [4, TR, TC]

        xf = x.astype(jnp.float32)

        out = pl.pallas_call(
            _jpeg_kernel,
            out_shape=jax.ShapeDtypeStruct((B, 3, H, W), jnp.float32),
            grid_spec=pltpu.PrefetchScalarGridSpec(
                num_scalar_prefetch=0,
                grid=(B, nR, nC),
                in_specs=[
                    pl.BlockSpec((TR, TR), lambda b, i, j: (0, 0)),          # kron(I, C)
                    pl.BlockSpec((TR, TR), lambda b, i, j: (0, 0)),          # kron(I, C^T)
                    pl.BlockSpec((TC, TC), lambda b, i, j: (0, 0)),          # kron(I, C^T)
                    pl.BlockSpec((TC, TC), lambda b, i, j: (0, 0)),          # kron(I, C)
                    pl.BlockSpec((4, TR, TC), lambda b, i, j: (0, 0, 0)),    # q tables (stacked)
                    pl.BlockSpec((None, 3, TR, TC), lambda b, i, j: (b, 0, i, j)),  # RGB tile
                ],
                out_specs=pl.BlockSpec((None, 3, TR, TC), lambda b, i, j: (b, 0, i, j)),
                scratch_shapes=[pltpu.VMEM((3 * TR, TC), jnp.float32)],
            ),
            compiler_params=pltpu.CompilerParams(
                dimension_semantics=("parallel", "parallel", "parallel"),
            ),
        )(cl, cli, cr, cri, q_all, xf)
        return out


if __name__ == "__main__":
    key = jax.random.PRNGKey(0)
    k_x, k_params = jax.random.split(key)

    B, C, H, W = 2, 3, 64, 64  # module requires C=3 and H, W multiples of 8
    x = jax.random.uniform(k_x, (B, C, H, W), jnp.float32, 0.0, 255.0)

    model = LearnableJPEGPallas(image_shape=(C, H, W), key=k_params)
    out = jax.block_until_ready(model(x))

    assert out.shape == (B, C, H, W) and out.dtype == jnp.float32
    assert bool(jnp.all(jnp.isfinite(out)))
    assert bool(jnp.all((out >= 0.0) & (out <= 255.0)))
    print("KERNEL_OK")
</pallas_src>

<mosaic_0001>
module attributes {stable_mosaic.version = 11 : i64} {
  func.func @_jpeg_kernel(%arg0: i32, %arg1: i32, %arg2: i32, %arg3: memref<16x16xbf16, #tpu.memory_space<vmem>>, %arg4: memref<16x16xbf16, #tpu.memory_space<vmem>>, %arg5: memref<64x64xbf16, #tpu.memory_space<vmem>>, %arg6: memref<64x64xbf16, #tpu.memory_space<vmem>>, %arg7: memref<4x16x64xf32, #tpu.memory_space<vmem>>, %arg8: memref<1x3x16x64xf32, #tpu.memory_space<vmem>>, %arg9: memref<1x3x16x64xf32, #tpu.memory_space<vmem>>, %arg10: memref<48x64xf32, #tpu.memory_space<vmem>>) attributes {dimension_semantics = [#tpu.dimension_semantics<parallel>, #tpu.dimension_semantics<parallel>, #tpu.dimension_semantics<parallel>], iteration_bounds = array<i64: 2, 4, 1>, scalar_prefetch = 0 : i64, scratch_operands = 1 : i64, tpu.core_type = #tpu.core_type<tc>, window_params = [{pipeline_mode = #tpu.pipeline_mode<synchronous>, transform_indices = @transform_0, window_bounds = array<i64: 16, 16>}, {pipeline_mode = #tpu.pipeline_mode<synchronous>, transform_indices = @transform_1, window_bounds = array<i64: 16, 16>}, {pipeline_mode = #tpu.pipeline_mode<synchronous>, transform_indices = @transform_2, window_bounds = array<i64: 64, 64>}, {pipeline_mode = #tpu.pipeline_mode<synchronous>, transform_indices = @transform_3, window_bounds = array<i64: 64, 64>}, {pipeline_mode = #tpu.pipeline_mode<synchronous>, transform_indices = @transform_4, window_bounds = array<i64: 4, 16, 64>}, {transform_indices = @transform_5, window_bounds = array<i64: 1, 3, 16, 64>}, {transform_indices = @transform_6, window_bounds = array<i64: 1, 3, 16, 64>}]} {
    %c0 = arith.constant 0 : index
    %c0_0 = arith.constant 0 : index
    %c0_1 = arith.constant 0 : index
    %c0_2 = arith.constant 0 : index
    %0 = vector.load %arg8[%c0, %c0_0, %c0_1, %c0_2] : memref<1x3x16x64xf32, #tpu.memory_space<vmem>>, vector<1x1x16x64xf32>
    %1 = vector.shape_cast %0 : vector<1x1x16x64xf32> to vector<16x64xf32>
    %c0_3 = arith.constant 0 : index
    %c1 = arith.constant 1 : index
    %c0_4 = arith.constant 0 : index
    %c0_5 = arith.constant 0 : index
    %2 = vector.load %arg8[%c0_3, %c1, %c0_4, %c0_5] : memref<1x3x16x64xf32, #tpu.memory_space<vmem>>, vector<1x1x16x64xf32>
    %3 = vector.shape_cast %2 : vector<1x1x16x64xf32> to vector<16x64xf32>
    %c0_6 = arith.constant 0 : index
    %c2 = arith.constant 2 : index
    %c0_7 = arith.constant 0 : index
    %c0_8 = arith.constant 0 : index
    %4 = vector.load %arg8[%c0_6, %c2, %c0_7, %c0_8] : memref<1x3x16x64xf32, #tpu.memory_space<vmem>>, vector<1x1x16x64xf32>
    %5 = vector.shape_cast %4 : vector<1x1x16x64xf32> to vector<16x64xf32>
    %cst = arith.constant 2.990000e-01 : f32
    %6 = vector.broadcast %cst : f32 to vector<16x64xf32>
    %7 = arith.mulf %1, %6 : vector<16x64xf32>
    %cst_9 = arith.constant 5.870000e-01 : f32
    %8 = vector.broadcast %cst_9 : f32 to vector<16x64xf32>
    %9 = arith.mulf %3, %8 : vector<16x64xf32>
    %10 = arith.addf %7, %9 : vector<16x64xf32>
    %cst_10 = arith.constant 1.140000e-01 : f32
    %11 = vector.broadcast %cst_10 : f32 to vector<16x64xf32>
    %12 = arith.mulf %5, %11 : vector<16x64xf32>
    %13 = arith.addf %10, %12 : vector<16x64xf32>
    %c0_11 = arith.constant 0 : index
    %c0_12 = arith.constant 0 : index
    %14 = vector.load %arg10[%c0_11, %c0_12] : memref<48x64xf32, #tpu.memory_space<vmem>>, vector<16x64xf32>
    tpu.vector_store %arg10[%c0_11, %c0_12], %13 {strides = array<i32>} : memref<48x64xf32, #tpu.memory_space<vmem>>, vector<16x64xf32>,
    %cst_13 = arith.constant -1.687360e-01 : f32
    %15 = vector.broadcast %cst_13 : f32 to vector<16x64xf32>
    %16 = arith.mulf %1, %15 : vector<16x64xf32>
    %cst_14 = arith.constant -3.312640e-01 : f32
    %17 = vector.broadcast %cst_14 : f32 to vector<16x64xf32>
    %18 = arith.mulf %3, %17 : vector<16x64xf32>
    %19 = arith.addf %16, %18 : vector<16x64xf32>
    %cst_15 = arith.constant 5.000000e-01 : f32
    %20 = vector.broadcast %cst_15 : f32 to vector<16x64xf32>
    %21 = arith.mulf %5, %20 : vector<16x64xf32>
    %22 = arith.addf %19, %21 : vector<16x64xf32>
    %cst_16 = arith.constant 1.280000e+02 : f32
    %23 = vector.broadcast %cst_16 : f32 to vector<16x64xf32>
    %24 = arith.addf %22, %23 : vector<16x64xf32>
    %c16 = arith.constant 16 : index
    %c0_17 = arith.constant 0 : index
    %25 = vector.load %arg10[%c16, %c0_17] : memref<48x64xf32, #tpu.memory_space<vmem>>, vector<16x64xf32>
    tpu.vector_store %arg10[%c16, %c0_17], %24 {strides = array<i32>} : memref<48x64xf32, #tpu.memory_space<vmem>>, vector<16x64xf32>,
    %cst_18 = arith.constant 5.000000e-01 : f32
    %26 = vector.broadcast %cst_18 : f32 to vector<16x64xf32>
    %27 = arith.mulf %1, %26 : vector<16x64xf32>
    %cst_19 = arith.constant -4.186880e-01 : f32
    %28 = vector.broadcast %cst_19 : f32 to vector<16x64xf32>
    %29 = arith.mulf %3, %28 : vector<16x64xf32>
    %30 = arith.addf %27, %29 : vector<16x64xf32>
    %cst_20 = arith.constant -8.131200e-02 : f32
    %31 = vector.broadcast %cst_20 : f32 to vector<16x64xf32>
    %32 = arith.mulf %5, %31 : vector<16x64xf32>
    %33 = arith.addf %30, %32 : vector<16x64xf32>
    %cst_21 = arith.constant 1.280000e+02 : f32
    %34 = vector.broadcast %cst_21 : f32 to vector<16x64xf32>
    %35 = arith.addf %33, %34 : vector<16x64xf32>
    %c32 = arith.constant 32 : index
    %c0_22 = arith.constant 0 : index
    %36 = vector.load %arg10[%c32, %c0_22] : memref<48x64xf32, #tpu.memory_space<vmem>>, vector<16x64xf32>
    tpu.vector_store %arg10[%c32, %c0_22], %35 {strides = array<i32>} : memref<48x64xf32, #tpu.memory_space<vmem>>, vector<16x64xf32>,
    %c0_23 = arith.constant 0 : index
    %c0_24 = arith.constant 0 : index
    %37 = vector.load %arg10[%c0_23, %c0_24] : memref<48x64xf32, #tpu.memory_space<vmem>>, vector<48x64xf32>
    %38 = arith.truncf %37 : vector<48x64xf32> to vector<48x64xbf16>
    %c0_25 = arith.constant 0 : index
    %c0_26 = arith.constant 0 : index
    %39 = vector.load %arg5[%c0_25, %c0_26] : memref<64x64xbf16, #tpu.memory_space<vmem>>, vector<64x64xbf16>
    %cst_27 = arith.constant dense<0.000000e+00> : vector<48x64xf32>
    %40 = tpu.matmul %38, %39, %cst_27 {dimension_numbers = #tpu.dot_dimension_numbers<[1], [0], [0], [1], [0, 0, 1, 1], [], []>} : vector<48x64xbf16>, vector<64x64xbf16>, vector<48x64xf32> -> vector<48x64xf32>
    %c0_28 = arith.constant 0 : index
    %c0_29 = arith.constant 0 : index
    %41 = vector.load %arg3[%c0_28, %c0_29] : memref<16x16xbf16, #tpu.memory_space<vmem>>, vector<16x16xbf16>
    %42 = vector.extract_strided_slice %40 {offsets = [0, 0], sizes = [16, 64], strides = [1, 1]} : vector<48x64xf32> to vector<16x64xf32>
    %43 = arith.truncf %42 : vector<16x64xf32> to vector<16x64xbf16>
    %cst_30 = arith.constant dense<0.000000e+00> : vector<16x64xf32>
    %44 = tpu.matmul %41, %43, %cst_30 {dimension_numbers = #tpu.dot_dimension_numbers<[1], [0], [0], [1], [0, 0, 1, 1], [], []>} : vector<16x16xbf16>, vector<16x64xbf16>, vector<16x64xf32> -> vector<16x64xf32>
    %c0_31 = arith.constant 0 : index
    %c0_32 = arith.constant 0 : index
    %c0_33 = arith.constant 0 : index
    %45 = vector.load %arg7[%c0_31, %c0_32, %c0_33] : memref<4x16x64xf32, #tpu.memory_space<vmem>>, vector<1x16x64xf32>
    %46 = vector.shape_cast %45 : vector<1x16x64xf32> to vector<16x64xf32>
    %c1_34 = arith.constant 1 : index
    %c0_35 = arith.constant 0 : index
    %c0_36 = arith.constant 0 : index
    %47 = vector.load %arg7[%c1_34, %c0_35, %c0_36] : memref<4x16x64xf32, #tpu.memory_space<vmem>>, vector<1x16x64xf32>
    %48 = vector.shape_cast %47 : vector<1x16x64xf32> to vector<16x64xf32>
    %49 = arith.mulf %44, %48 : vector<16x64xf32>
    %50 = math.roundeven %49 : vector<16x64xf32>
    %51 = arith.mulf %50, %46 : vector<16x64xf32>
    %c0_37 = arith.constant 0 : index
    %c0_38 = arith.constant 0 : index
    %52 = vector.load %arg10[%c0_37, %c0_38] : memref<48x64xf32, #tpu.memory_space<vmem>>, vector<16x64xf32>
    tpu.vector_store %arg10[%c0_37, %c0_38], %51 {strides = array<i32>} : memref<48x64xf32, #tpu.memory_space<vmem>>, vector<16x64xf32>,
    %53 = vector.extract_strided_slice %40 {offsets = [16, 0], sizes = [16, 64], strides = [1, 1]} : vector<48x64xf32> to vector<16x64xf32>
    %54 = arith.truncf %53 : vector<16x64xf32> to vector<16x64xbf16>
    %cst_39 = arith.constant dense<0.000000e+00> : vector<16x64xf32>
    %55 = tpu.matmul %41, %54, %cst_39 {dimension_numbers = #tpu.dot_dimension_numbers<[1], [0], [0], [1], [0, 0, 1, 1], [], []>} : vector<16x16xbf16>, vector<16x64xbf16>, vector<16x64xf32> -> vector<16x64xf32>
    %c2_40 = arith.constant 2 : index
    %c0_41 = arith.constant 0 : index
    %c0_42 = arith.constant 0 : index
    %56 = vector.load %arg7[%c2_40, %c0_41, %c0_42] : memref<4x16x64xf32, #tpu.memory_space<vmem>>, vector<1x16x64xf32>
    %57 = vector.shape_cast %56 : vector<1x16x64xf32> to vector<16x64xf32>
    %c3 = arith.constant 3 : index
    %c0_43 = arith.constant 0 : index
    %c0_44 = arith.constant 0 : index
    %58 = vector.load %arg7[%c3, %c0_43, %c0_44] : memref<4x16x64xf32, #tpu.memory_space<vmem>>, vector<1x16x64xf32>
    %59 = vector.shape_cast %58 : vector<1x16x64xf32> to vector<16x64xf32>
    %60 = arith.mulf %55, %59 : vector<16x64xf32>
    %61 = math.roundeven %60 : vector<16x64xf32>
    %62 = arith.mulf %61, %57 : vector<16x64xf32>
    %c16_45 = arith.constant 16 : index
    %c0_46 = arith.constant 0 : index
    %63 = vector.load %arg10[%c16_45, %c0_46] : memref<48x64xf32, #tpu.memory_space<vmem>>, vector<16x64xf32>
    tpu.vector_store %arg10[%c16_45, %c0_46], %62 {strides = array<i32>} : memref<48x64xf32, #tpu.memory_space<vmem>>, vector<16x64xf32>,
    %64 = vector.extract_strided_slice %40 {offsets = [32, 0], sizes = [16, 64], strides = [1, 1]} : vector<48x64xf32> to vector<16x64xf32>
    %65 = arith.truncf %64 : vector<16x64xf32> to vector<16x64xbf16>
    %cst_47 = arith.constant dense<0.000000e+00> : vector<16x64xf32>
    %66 = tpu.matmul %41, %65, %cst_47 {dimension_numbers = #tpu.dot_dimension_numbers<[1], [0], [0], [1], [0, 0, 1, 1], [], []>} : vector<16x16xbf16>, vector<16x64xbf16>, vector<16x64xf32> -> vector<16x64xf32>
    %c2_48 = arith.constant 2 : index
    %c0_49 = arith.constant 0 : index
    %c0_50 = arith.constant 0 : index
    %67 = vector.load %arg7[%c2_48, %c0_49, %c0_50] : memref<4x16x64xf32, #tpu.memory_space<vmem>>, vector<1x16x64xf32>
    %68 = vector.shape_cast %67 : vector<1x16x64xf32> to vector<16x64xf32>
    %c3_51 = arith.constant 3 : index
    %c0_52 = arith.constant 0 : index
    %c0_53 = arith.constant 0 : index
    %69 = vector.load %arg7[%c3_51, %c0_52, %c0_53] : memref<4x16x64xf32, #tpu.memory_space<vmem>>, vector<1x16x64xf32>
    %70 = vector.shape_cast %69 : vector<1x16x64xf32> to vector<16x64xf32>
    %71 = arith.mulf %66, %70 : vector<16x64xf32>
    %72 = math.roundeven %71 : vector<16x64xf32>
    %73 = arith.mulf %72, %68 : vector<16x64xf32>
    %c32_54 = arith.constant 32 : index
    %c0_55 = arith.constant 0 : index
    %74 = vector.load %arg10[%c32_54, %c0_55] : memref<48x64xf32, #tpu.memory_space<vmem>>, vector<16x64xf32>
    tpu.vector_store %arg10[%c32_54, %c0_55], %73 {strides = array<i32>} : memref<48x64xf32, #tpu.memory_space<vmem>>, vector<16x64xf32>,
    %c0_56 = arith.constant 0 : index
    %c0_57 = arith.constant 0 : index
    %75 = vector.load %arg4[%c0_56, %c0_57] : memref<16x16xbf16, #tpu.memory_space<vmem>>, vector<16x16xbf16>
    %c0_58 = arith.constant 0 : index
    %c0_59 = arith.constant 0 : index
    %76 = vector.load %arg10[%c0_58, %c0_59] : memref<48x64xf32, #tpu.memory_space<vmem>>, vector<16x64xf32>
    %77 = arith.truncf %76 : vector<16x64xf32> to vector<16x64xbf16>
    %cst_60 = arith.constant dense<0.000000e+00> : vector<16x64xf32>
    %78 = tpu.matmul %75, %77, %cst_60 {dimension_numbers = #tpu.dot_dimension_numbers<[1], [0], [0], [1], [0, 0, 1, 1], [], []>} : vector<16x16xbf16>, vector<16x64xbf16>, vector<16x64xf32> -> vector<16x64xf32>
    %c0_61 = arith.constant 0 : index
    %c0_62 = arith.constant 0 : index
    %79 = vector.load %arg10[%c0_61, %c0_62] : memref<48x64xf32, #tpu.memory_space<vmem>>, vector<16x64xf32>
    tpu.vector_store %arg10[%c0_61, %c0_62], %78 {strides = array<i32>} : memref<48x64xf32, #tpu.memory_space<vmem>>, vector<16x64xf32>,
    %c16_63 = arith.constant 16 : index
    %c0_64 = arith.constant 0 : index
    %80 = vector.load %arg10[%c16_63, %c0_64] : memref<48x64xf32, #tpu.memory_space<vmem>>, vector<16x64xf32>
    %81 = arith.truncf %80 : vector<16x64xf32> to vector<16x64xbf16>
    %cst_65 = arith.constant dense<0.000000e+00> : vector<16x64xf32>
    %82 = tpu.matmul %75, %81, %cst_65 {dimension_numbers = #tpu.dot_dimension_numbers<[1], [0], [0], [1], [0, 0, 1, 1], [], []>} : vector<16x16xbf16>, vector<16x64xbf16>, vector<16x64xf32> -> vector<16x64xf32>
    %c16_66 = arith.constant 16 : index
    %c0_67 = arith.constant 0 : index
    %83 = vector.load %arg10[%c16_66, %c0_67] : memref<48x64xf32, #tpu.memory_space<vmem>>, vector<16x64xf32>
    tpu.vector_store %arg10[%c16_66, %c0_67], %82 {strides = array<i32>} : memref<48x64xf32, #tpu.memory_space<vmem>>, vector<16x64xf32>,
    %c32_68 = arith.constant 32 : index
    %c0_69 = arith.constant 0 : index
    %84 = vector.load %arg10[%c32_68, %c0_69] : memref<48x64xf32, #tpu.memory_space<vmem>>, vector<16x64xf32>
    %85 = arith.truncf %84 : vector<16x64xf32> to vector<16x64xbf16>
    %cst_70 = arith.constant dense<0.000000e+00> : vector<16x64xf32>
    %86 = tpu.matmul %75, %85, %cst_70 {dimension_numbers = #tpu.dot_dimension_numbers<[1], [0], [0], [1], [0, 0, 1, 1], [], []>} : vector<16x16xbf16>, vector<16x64xbf16>, vector<16x64xf32> -> vector<16x64xf32>
    %c32_71 = arith.constant 32 : index
    %c0_72 = arith.constant 0 : index
    %87 = vector.load %arg10[%c32_71, %c0_72] : memref<48x64xf32, #tpu.memory_space<vmem>>, vector<16x64xf32>
    tpu.vector_store %arg10[%c32_71, %c0_72], %86 {strides = array<i32>} : memref<48x64xf32, #tpu.memory_space<vmem>>, vector<16x64xf32>,
    %c0_73 = arith.constant 0 : index
    %c0_74 = arith.constant 0 : index
    %88 = vector.load %arg10[%c0_73, %c0_74] : memref<48x64xf32, #tpu.memory_space<vmem>>, vector<48x64xf32>
    %89 = arith.truncf %88 : vector<48x64xf32> to vector<48x64xbf16>
    %c0_75 = arith.constant 0 : index
    %c0_76 = arith.constant 0 : index
    %90 = vector.load %arg6[%c0_75, %c0_76] : memref<64x64xbf16, #tpu.memory_space<vmem>>, vector<64x64xbf16>
    %cst_77 = arith.constant dense<0.000000e+00> : vector<48x64xf32>
    %91 = tpu.matmul %89, %90, %cst_77 {dimension_numbers = #tpu.dot_dimension_numbers<[1], [0], [0], [1], [0, 0, 1, 1], [], []>} : vector<48x64xbf16>, vector<64x64xbf16>, vector<48x64xf32> -> vector<48x64xf32>
    %92 = vector.extract_strided_slice %91 {offsets = [0, 0], sizes = [16, 64], strides = [1, 1]} : vector<48x64xf32> to vector<16x64xf32>
    %93 = vector.extract_strided_slice %91 {offsets = [16, 0], sizes = [16, 64], strides = [1, 1]} : vector<48x64xf32> to vector<16x64xf32>
    %94 = vector.extract_strided_slice %91 {offsets = [32, 0], sizes = [16, 64], strides = [1, 1]} : vector<48x64xf32> to vector<16x64xf32>
    %cst_78 = arith.constant 1.402000e+00 : f32
    %95 = vector.broadcast %cst_78 : f32 to vector<16x64xf32>
    %96 = arith.mulf %94, %95 : vector<16x64xf32>
    %97 = arith.addf %92, %96 : vector<16x64xf32>
    %cst_79 = arith.constant 1.794560e+02 : f32
    %98 = vector.broadcast %cst_79 : f32 to vector<16x64xf32>
    %99 = arith.subf %97, %98 : vector<16x64xf32>
    %cst_80 = arith.constant 0.000000e+00 : f32
    %cst_81 = arith.constant 2.550000e+02 : f32
    %100 = vector.broadcast %cst_80 : f32 to vector<16x64xf32>
    %101 = arith.maximumf %100, %99 : vector<16x64xf32>
    %102 = vector.broadcast %cst_81 : f32 to vector<16x64xf32>
    %103 = arith.minimumf %102, %101 : vector<16x64xf32>
    %c0_82 = arith.constant 0 : index
    %c0_83 = arith.constant 0 : index
    %c0_84 = arith.constant 0 : index
    %c0_85 = arith.constant 0 : index
    %104 = vector.load %arg9[%c0_82, %c0_83, %c0_84, %c0_85] : memref<1x3x16x64xf32, #tpu.memory_space<vmem>>, vector<1x1x16x64xf32>
    %105 = vector.shape_cast %104 : vector<1x1x16x64xf32> to vector<16x64xf32>
    %106 = vector.shape_cast %103 : vector<16x64xf32> to vector<1x1x16x64xf32>
    tpu.vector_store %arg9[%c0_82, %c0_83, %c0_84, %c0_85], %106 {strides = array<i32>} : memref<1x3x16x64xf32, #tpu.memory_space<vmem>>, vector<1x1x16x64xf32>,
    %cst_86 = arith.constant -3.441360e-01 : f32
    %107 = vector.broadcast %cst_86 : f32 to vector<16x64xf32>
    %108 = arith.mulf %93, %107 : vector<16x64xf32>
    %109 = arith.addf %92, %108 : vector<16x64xf32>
    %cst_87 = arith.constant -7.141360e-01 : f32
    %110 = vector.broadcast %cst_87 : f32 to vector<16x64xf32>
    %111 = arith.mulf %94, %110 : vector<16x64xf32>
    %112 = arith.addf %109, %111 : vector<16x64xf32>
    %cst_88 = arith.constant 135.458817 : f32
    %113 = vector.broadcast %cst_88 : f32 to vector<16x64xf32>
    %114 = arith.addf %112, %113 : vector<16x64xf32>
    %cst_89 = arith.constant 0.000000e+00 : f32
    %cst_90 = arith.constant 2.550000e+02 : f32
    %115 = vector.broadcast %cst_89 : f32 to vector<16x64xf32>
    %116 = arith.maximumf %115, %114 : vector<16x64xf32>
    %117 = vector.broadcast %cst_90 : f32 to vector<16x64xf32>
    %118 = arith.minimumf %117, %116 : vector<16x64xf32>
    %c0_91 = arith.constant 0 : index
    %c1_92 = arith.constant 1 : index
    %c0_93 = arith.constant 0 : index
    %c0_94 = arith.constant 0 : index
    %119 = vector.load %arg9[%c0_91, %c1_92, %c0_93, %c0_94] : memref<1x3x16x64xf32, #tpu.memory_space<vmem>>, vector<1x1x16x64xf32>
    %120 = vector.shape_cast %119 : vector<1x1x16x64xf32> to vector<16x64xf32>
    %121 = vector.shape_cast %118 : vector<16x64xf32> to vector<1x1x16x64xf32>
    tpu.vector_store %arg9[%c0_91, %c1_92, %c0_93, %c0_94], %121 {strides = array<i32>} : memref<1x3x16x64xf32, #tpu.memory_space<vmem>>, vector<1x1x16x64xf32>,
    %cst_95 = arith.constant 1.722000e+00 : f32
    %122 = vector.broadcast %cst_95 : f32 to vector<16x64xf32>
    %123 = arith.mulf %93, %122 : vector<16x64xf32>
    %124 = arith.addf %92, %123 : vector<16x64xf32>
    %cst_96 = arith.constant 2.204160e+02 : f32
    %125 = vector.broadcast %cst_96 : f32 to vector<16x64xf32>
    %126 = arith.subf %124, %125 : vector<16x64xf32>
    %cst_97 = arith.constant 0.000000e+00 : f32
    %cst_98 = arith.constant 2.550000e+02 : f32
    %127 = vector.broadcast %cst_97 : f32 to vector<16x64xf32>
    %128 = arith.maximumf %127, %126 : vector<16x64xf32>
    %129 = vector.broadcast %cst_98 : f32 to vector<16x64xf32>
    %130 = arith.minimumf %129, %128 : vector<16x64xf32>
    %c0_99 = arith.constant 0 : index
    %c2_100 = arith.constant 2 : index
    %c0_101 = arith.constant 0 : index
    %c0_102 = arith.constant 0 : index
    %131 = vector.load %arg9[%c0_99, %c2_100, %c0_101, %c0_102] : memref<1x3x16x64xf32, #tpu.memory_space<vmem>>, vector<1x1x16x64xf32>
    %132 = vector.shape_cast %131 : vector<1x1x16x64xf32> to vector<16x64xf32>
    %133 = vector.shape_cast %130 : vector<16x64xf32> to vector<1x1x16x64xf32>
    tpu.vector_store %arg9[%c0_99, %c2_100, %c0_101, %c0_102], %133 {strides = array<i32>} : memref<1x3x16x64xf32, #tpu.memory_space<vmem>>, vector<1x1x16x64xf32>,
    return
  }
  func.func @transform_0(%arg0: i32, %arg1: i32, %arg2: i32) -> (i32, i32) {
    %c0_i32 = arith.constant 0 : i32
    %c0_i32_0 = arith.constant 0 : i32
    %c0_i32_1 = arith.constant 0 : i32
    return %c0_i32, %c0_i32_0 : i32, i32
  }
  func.func @transform_1(%arg0: i32, %arg1: i32, %arg2: i32) -> (i32, i32) {
    %c0_i32 = arith.constant 0 : i32
    %c0_i32_0 = arith.constant 0 : i32
    %c0_i32_1 = arith.constant 0 : i32
    return %c0_i32, %c0_i32_0 : i32, i32
  }
  func.func @transform_2(%arg0: i32, %arg1: i32, %arg2: i32) -> (i32, i32) {
    %c0_i32 = arith.constant 0 : i32
    %c0_i32_0 = arith.constant 0 : i32
    %c0_i32_1 = arith.constant 0 : i32
    return %c0_i32, %c0_i32_0 : i32, i32
  }
  func.func @transform_3(%arg0: i32, %arg1: i32, %arg2: i32) -> (i32, i32) {
    %c0_i32 = arith.constant 0 : i32
    %c0_i32_0 = arith.constant 0 : i32
    %c0_i32_1 = arith.constant 0 : i32
    return %c0_i32, %c0_i32_0 : i32, i32
  }
  func.func @transform_4(%arg0: i32, %arg1: i32, %arg2: i32) -> (i32, i32, i32) {
    %c0_i32 = arith.constant 0 : i32
    %c0_i32_0 = arith.constant 0 : i32
    %c0_i32_1 = arith.constant 0 : i32
    %c0_i32_2 = arith.constant 0 : i32
    return %c0_i32, %c0_i32_0, %c0_i32_1 : i32, i32, i32
  }
  func.func @transform_5(%arg0: i32, %arg1: i32, %arg2: i32) -> (i32, i32, i32, i32) {
    %c0_i32 = arith.constant 0 : i32
    %c0_i32_0 = arith.constant 0 : i32
    return %arg0, %c0_i32, %arg1, %arg2 : i32, i32, i32, i32
  }
  func.func @transform_6(%arg0: i32, %arg1: i32, %arg2: i32) -> (i32, i32, i32, i32) {
    %c0_i32 = arith.constant 0 : i32
    %c0_i32_0 = arith.constant 0 : i32
    return %arg0, %c0_i32, %arg1, %arg2 : i32, i32, i32, i32
  }
}

</mosaic_0001>

<llo_original>
// kernel: tile.20
$region0: #{tile.20}
  #allocation0 [shape = 's32[1]{0}', space=sflag, size = 0x4, scoped, tag = 'scoped memory for tile.20']
  %s0 = inlined_call_operand.vmem [shape: f32[8,8], index: 0, kind: input, shape index: {}]
  %s1 = inlined_call_operand.vmem [shape: f32[2,8,8,8], index: 1, kind: output, shape index: {}]
  // Predicated region
  $region2: #{tile.20} parent=0 // pred_check
    _
  $region3: #{tile.20} parent=0 // pred_check_branch
    %3 = sbr.rel (0) target = $region5
  $region4: #{tile.20} parent=0 // pred_region
    _
  $region5: #{tile.20} parent=0 // pred_fallthru
    _
  %v4 = vld [vmem:[%s0] ss:$0 sm:$0xff]
  %5 = vst [vmem:[%s1] sm:$0xff] %v4
  %s6 = scalar_lea.vmem %s1, 64
  %7 = vst [vmem:[%s6] sm:$0xff] %v4
  %s8 = scalar_lea.vmem %s0, 1
  %v9 = vld [vmem:[%s8] ss:$0 sm:$0xff]
  %s10 = scalar_lea.vmem %s1, 8
  %11 = vst [vmem:[%s10] sm:$0xff] %v9
  %s12 = scalar_lea.vmem %s1, 72
  %13 = vst [vmem:[%s12] sm:$0xff] %v9
  %s14 = scalar_lea.vmem %s0, 2
  %v15 = vld [vmem:[%s14] ss:$0 sm:$0xff]
  %s16 = scalar_lea.vmem %s1, 16
  %17 = vst [vmem:[%s16] sm:$0xff] %v15
  %s18 = scalar_lea.vmem %s1, 80
  %19 = vst [vmem:[%s18] sm:$0xff] %v15
  %s20 = scalar_lea.vmem %s0, 3
  %v21 = vld [vmem:[%s20] ss:$0 sm:$0xff]
  %s22 = scalar_lea.vmem %s1, 24
  %23 = vst [vmem:[%s22] sm:$0xff] %v21
  %s24 = scalar_lea.vmem %s1, 88
  %25 = vst [vmem:[%s24] sm:$0xff] %v21
  %s26 = scalar_lea.vmem %s0, 4
  %v27 = vld [vmem:[%s26] ss:$0 sm:$0xff]
  %s28 = scalar_lea.vmem %s1, 32
  %29 = vst [vmem:[%s28] sm:$0xff] %v27
  %s30 = scalar_lea.vmem %s1, 96
  %31 = vst [vmem:[%s30] sm:$0xff] %v27
  %s32 = scalar_lea.vmem %s0, 5
  %v33 = vld [vmem:[%s32] ss:$0 sm:$0xff]
  %s34 = scalar_lea.vmem %s1, 40
  %35 = vst [vmem:[%s34] sm:$0xff] %v33
  %s36 = scalar_lea.vmem %s1, 104
  %37 = vst [vmem:[%s36] sm:$0xff] %v33
  %s38 = scalar_lea.vmem %s0, 6
  %v39 = vld [vmem:[%s38] ss:$0 sm:$0xff]
  %s40 = scalar_lea.vmem %s1, 48
  %41 = vst [vmem:[%s40] sm:$0xff] %v39
  %s42 = scalar_lea.vmem %s1, 112
  %43 = vst [vmem:[%s42] sm:$0xff] %v39
  %s44 = scalar_lea.vmem %s0, 7
  %v45 = vld [vmem:[%s44] ss:$0 sm:$0xff]
  %s46 = scalar_lea.vmem %s1, 56
  %47 = vst [vmem:[%s46] sm:$0xff] %v45
  %s48 = scalar_lea.vmem %s1, 120
  %49 = vst [vmem:[%s48] sm:$0xff] %v45

// kernel: tile.23
$region0: #{tile.23}
  %s0 = inlined_call_operand.vmem [shape: f32[2,8,8,8], index: 0, kind: input, shape index: {}]
  %s1 = inlined_call_operand.vmem [shape: f32[1,16,64], index: 1, kind: output, shape index: {}]
  %v2 = vld [vmem:[%s0] ss:$8 sm:$0xf]
  %v3 = vld [vmem:[%s0] ss:$8 sm:$0xf0]
  %vm4 = vcmask 1047556
  %v5 = vsel %vm4, %v3, %v2
  %vm6 = vcmask 64512
  %7 = vst.msk [vmem:[%s1] sm:$0xff] %vm6, %v5
  %s8 = scalar_lea.vmem %s0, 64
  %v9 = vld [vmem:[%s8] ss:$8 sm:$0xf]
  %s10 = scalar_lea.vmem %s0, 64
  %v11 = vld [vmem:[%s10] ss:$8 sm:$0xf0]
  %vm12 = vcmask 1047556
  %v13 = vsel %vm12, %v11, %v9
  %vm14 = vcmask 64512
  %s15 = scalar_lea.vmem %s1, 8
  %16 = vst.msk [vmem:[%s15] sm:$0xff] %vm14, %v13
  %s17 = scalar_lea.vmem %s0, 7
  %v18 = vld [vmem:[%s17] ss:$8 sm:$0xf]
  %s19 = scalar_lea.vmem %s0, 7
  %v20 = vld [vmem:[%s19] ss:$8 sm:$0xf0]
  %vm21 = vcmask 1047556
  %v22 = vsel %vm21, %v20, %v18
  %23 = vrot.lane.b32.xlu0 %v22, 56
  %v24 = vpop.permute.xlu0 %23
  %vm25 = vcmask 523712
  %26 = vst.msk [vmem:[%s1] sm:$0xff] %vm25, %v24
  %s27 = scalar_lea.vmem %s0, 71
  %v28 = vld [vmem:[%s27] ss:$8 sm:$0xf]
  %s29 = scalar_lea.vmem %s0, 71
  %v30 = vld [vmem:[%s29] ss:$8 sm:$0xf0]
  %vm31 = vcmask 1047556
  %v32 = vsel %vm31, %v30, %v28
  %33 = vrot.lane.b32.xlu0 %v32, 56
  %v34 = vpop.permute.xlu0 %33
  %vm35 = vcmask 523712
  %s36 = scalar_lea.vmem %s1, 8
  %37 = vst.msk [vmem:[%s36] sm:$0xff] %vm35, %v34
  %s38 = scalar_lea.vmem %s0, 6
  %v39 = vld [vmem:[%s38] ss:$8 sm:$0xf]
  %s40 = scalar_lea.vmem %s0, 6
  %v41 = vld [vmem:[%s40] ss:$8 sm:$0xf0]
  %vm42 = vcmask 1047556
  %v43 = vsel %vm42, %v41, %v39
  %44 = vrot.lane.b32.xlu0 %v43, 48
  %v45 = vpop.permute.xlu0 %44
  %vm46 = vcmask 458112
  %47 = vst.msk [vmem:[%s1] sm:$0xff] %vm46, %v45
  %s48 = scalar_lea.vmem %s0, 70
  %v49 = vld [vmem:[%s48] ss:$8 sm:$0xf]
  %s50 = scalar_lea.vmem %s0, 70
  %v51 = vld [vmem:[%s50] ss:$8 sm:$0xf0]
  %vm52 = vcmask 1047556
  %v53 = vsel %vm52, %v51, %v49
  %54 = vrot.lane.b32.xlu0 %v53, 48
  %v55 = vpop.permute.xlu0 %54
  %vm56 = vcmask 458112
  %s57 = scalar_lea.vmem %s1, 8
  %58 = vst.msk [vmem:[%s57] sm:$0xff] %vm56, %v55
  %s59 = scalar_lea.vmem %s0, 5
  %v60 = vld [vmem:[%s59] ss:$8 sm:$0xf]
  %s61 = scalar_lea.vmem %s0, 5
  %v62 = vld [vmem:[%s61] ss:$8 sm:$0xf0]
  %vm63 = vcmask 1047556
  %v64 = vsel %vm63, %v62, %v60
  %65 = vrot.lane.b32.xlu0 %v64, 40
  %v66 = vpop.permute.xlu0 %65
  %vm67 = vcmask 392512
  %68 = vst.msk [vmem:[%s1] sm:$0xff] %vm67, %v66
  %s69 = scalar_lea.vmem %s0, 69
  %v70 = vld [vmem:[%s69] ss:$8 sm:$0xf]
  %s71 = scalar_lea.vmem %s0, 69
  %v72 = vld [vmem:[%s71] ss:$8 sm:$0xf0]
  %vm73 = vcmask 1047556
  %v74 = vsel %vm73, %v72, %v70
  %75 = vrot.lane.b32.xlu0 %v74, 40
  %v76 = vpop.permute.xlu0 %75
  %vm77 = vcmask 392512
  %s78 = scalar_lea.vmem %s1, 8
  %79 = vst.msk [vmem:[%s78] sm:$0xff] %vm77, %v76
  %s80 = scalar_lea.vmem %s0, 4
  %v81 = vld [vmem:[%s80] ss:$8 sm:$0xf]
  %s82 = scalar_lea.vmem %s0, 4
  %v83 = vld [vmem:[%s82] ss:$8 sm:$0xf0]
  %vm84 = vcmask 1047556
  %v85 = vsel %vm84, %v83, %v81
  %86 = vrot.lane.b32.xlu0 %v85, 32
  %v87 = vpop.permute.xlu0 %86
  %vm88 = vcmask 326912
  %89 = vst.msk [vmem:[%s1] sm:$0xff] %vm88, %v87
  %s90 = scalar_lea.vmem %s0, 68
  %v91 = vld [vmem:[%s90] ss:$8 sm:$0xf]
  %s92 = scalar_lea.vmem %s0, 68
  %v93 = vld [vmem:[%s92] ss:$8 sm:$0xf0]
  %vm94 = vcmask 1047556
  %v95 = vsel %vm94, %v93, %v91
  %96 = vrot.lane.b32.xlu0 %v95, 32
  %v97 = vpop.permute.xlu0 %96
  %vm98 = vcmask 326912
  %s99 = scalar_lea.vmem %s1, 8
  %100 = vst.msk [vmem:[%s99] sm:$0xff] %vm98, %v97
  %s101 = scalar_lea.vmem %s0, 3
  %v102 = vld [vmem:[%s101] ss:$8 sm:$0xf]
  %s103 = scalar_lea.vmem %s0, 3
  %v104 = vld [vmem:[%s103] ss:$8 sm:$0xf0]
  %vm105 = vcmask 1047556
  %v106 = vsel %vm105, %v104, %v102
  %107 = vrot.lane.b32.xlu0 %v106, 24
  %v108 = vpop.permute.xlu0 %107
  %vm109 = vcmask 261312
  %110 = vst.msk [vmem:[%s1] sm:$0xff] %vm109, %v108
  %s111 = scalar_lea.vmem %s0, 67
  %v112 = vld [vmem:[%s111] ss:$8 sm:$0xf]
  %s113 = scalar_lea.vmem %s0, 67
  %v114 = vld [vmem:[%s113] ss:$8 sm:$0xf0]
  %vm115 = vcmask 1047556
  %v116 = vsel %vm115, %v114, %v112
  %117 = vrot.lane.b32.xlu0 %v116, 24
  %v118 = vpop.permute.xlu0 %117
  %vm119 = vcmask 261312
  %s120 = scalar_lea.vmem %s1, 8
  %121 = vst.msk [vmem:[%s120] sm:$0xff] %vm119, %v118
  %s122 = scalar_lea.vmem %s0, 2
  %v123 = vld [vmem:[%s122] ss:$8 sm:$0xf]
  %s124 = scalar_lea.vmem %s0, 2
  %v125 = vld [vmem:[%s124] ss:$8 sm:$0xf0]
  %vm126 = vcmask 1047556
  %v127 = vsel %vm126, %v125, %v123
  %128 = vrot.lane.b32.xlu0 %v127, 16
  %v129 = vpop.permute.xlu0 %128
  %vm130 = vcmask 195712
  %131 = vst.msk [vmem:[%s1] sm:$0xff] %vm130, %v129
  %s132 = scalar_lea.vmem %s0, 66
  %v133 = vld [vmem:[%s132] ss:$8 sm:$0xf]
  %s134 = scalar_lea.vmem %s0, 66
  %v135 = vld [vmem:[%s134] ss:$8 sm:$0xf0]
  %vm136 = vcmask 1047556
  %v137 = vsel %vm136, %v135, %v133
  %138 = vrot.lane.b32.xlu0 %v137, 16
  %v139 = vpop.permute.xlu0 %138
  %vm140 = vcmask 195712
  %s141 = scalar_lea.vmem %s1, 8
  %142 = vst.msk [vmem:[%s141] sm:$0xff] %vm140, %v139
  %s143 = scalar_lea.vmem %s0, 1
  %v144 = vld [vmem:[%s143] ss:$8 sm:$0xf]
  %s145 = scalar_lea.vmem %s0, 1
  %v146 = vld [vmem:[%s145] ss:$8 sm:$0xf0]
  %vm147 = vcmask 1047556
  %v148 = vsel %vm147, %v146, %v144
  %149 = vrot.lane.b32.xlu0 %v148, 8
  %v150 = vpop.permute.xlu0 %149
  %vm151 = vcmask 130112
  %152 = vst.msk [vmem:[%s1] sm:$0xff] %vm151, %v150
  %s153 = scalar_lea.vmem %s0, 65
  %v154 = vld [vmem:[%s153] ss:$8 sm:$0xf]
  %s155 = scalar_lea.vmem %s0, 65
  %v156 = vld [vmem:[%s155] ss:$8 sm:$0xf0]
  %vm157 = vcmask 1047556
  %v158 = vsel %vm157, %v156, %v154
  %159 = vrot.lane.b32.xlu0 %v158, 8
  %v160 = vpop.permute.xlu0 %159
  %vm161 = vcmask 130112
  %s162 = scalar_lea.vmem %s1, 8
  %163 = vst.msk [vmem:[%s162] sm:$0xff] %vm161, %v160

// kernel: _forward.1
$region0: #{_forward.1}
  #allocation0 [shape = 'u32[]', space=smem, size = 0x4, offset = 0x4, fixed_abs, tag = 'smem constant byte address 0x4 - core index']
  #allocation1 [shape = 'u32[72,128]{1,0:T(1,128)}', space=vmem, size = 0x9000, scoped, tag = 'internal scratch']
  #allocation2 [shape = 'f32[48,64]{1,0:T(8,128)}', space=vmem, size = 0x6000, scoped, tag = 'scratch operand']
  #allocation6 [shape = 's32[]', space=sflag, size = 0x4, offset = 0, fixed_abs, tag = 'sflag constant byte address 0x0 - dummy sync flag']
  %s0 = inlined_call_operand.vmem [shape: bf16[16,16], index: 0, kind: input, shape index: {}]
  %s1 = inlined_call_operand.vmem [shape: bf16[16,16], index: 1, kind: input, shape index: {}]
  %s2 = inlined_call_operand.vmem [shape: bf16[64,64], index: 2, kind: input, shape index: {}]
  %s3 = inlined_call_operand.vmem [shape: bf16[64,64], index: 3, kind: input, shape index: {}]
  %s4 = inlined_call_operand.vmem [shape: f32[4,16,64], index: 4, kind: input, shape index: {}]
  %s5 = inlined_call_operand.vmem [shape: f32[2,3,64,64], index: 5, kind: input, shape index: {}]
  %s6 = inlined_call_operand.hbm [shape: f32[2,3,64,64], index: 6, kind: output, shape index: {}]
  %s7 = sld [smem:[#allocation0]]
  $region95: #{_forward.1} parent=0
    _
  %s9 = ssub.s32 1, %s7
  %s10 = scalar_select 0, %s9, %s7
  $region1: #{_forward.1} parent=0
    #allocation3 [shape = 'u8[49152]{0}', space=vmem, size = 0xc000, scoped, tag = 'input window, operand 5']
    #allocation4 [shape = 'u8[49152]{0}', space=vmem, size = 0xc000, scoped, tag = 'output window, operand 0']
    #allocation5 [shape = 's32[2]{0}', space=sflag, size = 0x8, scoped, tag = 'scoped memory for _forward.1']
    %11 = vsyncpa [#allocation5], 0
    %s12 = scalar_lea.sflag [#allocation5], 1
    %13 = vsyncpa %s12, 0
    loop: start=0, step=1, limit=10
    $region2: #{_forward.1} parent=1 // loop_pre_header
      _
    $region3: #{_forward.1} parent=1 // loop_header
      %s15 = sphi 0, %s19
      %p16 = scmp.ge.s32.totalorder %s15, 10
      %s22 = sphi 0, %s41
      %s23 = sphi 0, %s37
      %s24 = sphi 0, %s33
      %s25 = sphi 0, %s22
      %s26 = sphi 0, %s23
      %s27 = sphi 0, %s24
      %s28 = sphi 0, %s25
      %s29 = sphi 0, %s26
      %s30 = sphi 0, %s27
      %s42 = sphi 0, %s42
      %s44 = sphi 0, %s42
      %s45 = sphi 0, %s44
      %s59 = sphi 0, %s45
      %s63 = sphi 0, %s63
      %s65 = sphi 0, %s63
      %s66 = sphi 0, %s65
      %s80 = sphi 0, %s66
      %s84 = sphi 0, %s84
      %s86 = sphi 0, %s84
      %s87 = sphi 0, %s86
      %s101 = sphi 0, %s87
      %s105 = sphi 0, %s105
      %s107 = sphi 0, %s105
      %s108 = sphi 0, %s107
      %s122 = sphi 0, %s108
      %s126 = sphi 0, %s126
      %s128 = sphi 0, %s126
      %s129 = sphi 0, %s128
      %s143 = sphi 0, %s129
      %s153 = sphi 0, %s155
      %s156 = sphi 0, %s153
      %s157 = sphi 0, %s156
      %s173 = sphi 0, %s157
      %s183 = sphi 0, %s185
      %s186 = sphi 0, %s183
      %s187 = sphi 0, %s186
      %s203 = sphi 0, %s187
    $region4: #{_forward.1} parent=1 // loop_header_branch
      %18 = sbr.rel (%p16) target = $region8
    $region5: #{_forward.1} parent=1 // loop_body
      %s20 = ssub.s32 %s15, 1
      %s21 = ssub.s32 %s15, 2
      %s31 = sadd.s32 1, %s24
      %p32 = scmp.ge.s32.totalorder %s31, 1
      %s33 = scalar_select %p32, 0, %s31
      %s34 = sadd.s32 1, %s23
      %s35 = scalar_select %p32, %s34, %s23
      %p36 = scmp.ge.s32.totalorder %s35, 4
      %s37 = scalar_select %p36, 0, %s35
      %s38 = sadd.s32 1, %s22
      %s39 = scalar_select %p36, %s38, %s22
      %p40 = scmp.ge.s32.totalorder %s39, 2
      %s41 = scalar_select %p40, 0, %s39
      %s43 = sadd.s32 %s42, 1
      %p46 = scmp.eq.s32.totalorder %s15, 7
      %p47 = scmp.ne.s32.totalorder %s42, %s44
      %p48 = scmp.eq.s32.totalorder %s15, 0
      %p49 = por %p47, %p48
      %p50 = scmp.ne.s32.totalorder %s42, %s44
      %p51 = scmp.eq.s32.totalorder %s20, 7
      %p52 = por %p50, %p51
      %p53 = scmp.ne.s32.totalorder %s44, %s45
      %p54 = scmp.eq.s32.totalorder %s20, 0
      %p55 = por %p53, %p54
      %p56 = scmp.ne.s32.totalorder %s44, %s45
      %p57 = scmp.eq.s32.totalorder %s21, 7
      %p58 = por %p56, %p57
      %p60 = scmp.ne.s32.totalorder %s45, %s59
      %p61 = scmp.eq.s32.totalorder %s21, 0
      %p62 = por %p60, %p61
      %s64 = sadd.s32 %s63, 1
      %p67 = scmp.eq.s32.totalorder %s15, 7
      %p68 = scmp.ne.s32.totalorder %s63, %s65
      %p69 = scmp.eq.s32.totalorder %s15, 0
      %p70 = por %p68, %p69
      %p71 = scmp.ne.s32.totalorder %s63, %s65
      %p72 = scmp.eq.s32.totalorder %s20, 7
      %p73 = por %p71, %p72
      %p74 = scmp.ne.s32.totalorder %s65, %s66
      %p75 = scmp.eq.s32.totalorder %s20, 0
      %p76 = por %p74, %p75
      %p77 = scmp.ne.s32.totalorder %s65, %s66
      %p78 = scmp.eq.s32.totalorder %s21, 7
      %p79 = por %p77, %p78
      %p81 = scmp.ne.s32.totalorder %s66, %s80
      %p82 = scmp.eq.s32.totalorder %s21, 0
      %p83 = por %p81, %p82
      %s85 = sadd.s32 %s84, 1
      %p88 = scmp.eq.s32.totalorder %s15, 7
      %p89 = scmp.ne.s32.totalorder %s84, %s86
      %p90 = scmp.eq.s32.totalorder %s15, 0
      %p91 = por %p89, %p90
      %p92 = scmp.ne.s32.totalorder %s84, %s86
      %p93 = scmp.eq.s32.totalorder %s20, 7
      %p94 = por %p92, %p93
      %p95 = scmp.ne.s32.totalorder %s86, %s87
      %p96 = scmp.eq.s32.totalorder %s20, 0
      %p97 = por %p95, %p96
      %p98 = scmp.ne.s32.totalorder %s86, %s87
      %p99 = scmp.eq.s32.totalorder %s21, 7
      %p100 = por %p98, %p99
      %p102 = scmp.ne.s32.totalorder %s87, %s101
      %p103 = scmp.eq.s32.totalorder %s21, 0
      %p104 = por %p102, %p103
      %s106 = sadd.s32 %s105, 1
      %p109 = scmp.eq.s32.totalorder %s15, 7
      %p110 = scmp.ne.s32.totalorder %s105, %s107
      %p111 = scmp.eq.s32.totalorder %s15, 0
      %p112 = por %p110, %p111
      %p113 = scmp.ne.s32.totalorder %s105, %s107
      %p114 = scmp.eq.s32.totalorder %s20, 7
      %p115 = por %p113, %p114
      %p116 = scmp.ne.s32.totalorder %s107, %s108
      %p117 = scmp.eq.s32.totalorder %s20, 0
      %p118 = por %p116, %p117
      %p119 = scmp.ne.s32.totalorder %s107, %s108
      %p120 = scmp.eq.s32.totalorder %s21, 7
      %p121 = por %p119, %p120
      %p123 = scmp.ne.s32.totalorder %s108, %s122
      %p124 = scmp.eq.s32.totalorder %s21, 0
      %p125 = por %p123, %p124
      %s127 = sadd.s32 %s126, 1
      %p130 = scmp.eq.s32.totalorder %s15, 7
      %p131 = scmp.ne.s32.totalorder %s126, %s128
      %p132 = scmp.eq.s32.totalorder %s15, 0
      %p133 = por %p131, %p132
      %p134 = scmp.ne.s32.totalorder %s126, %s128
      %p135 = scmp.eq.s32.totalorder %s20, 7
      %p136 = por %p134, %p135
      %p137 = scmp.ne.s32.totalorder %s128, %s129
      %p138 = scmp.eq.s32.totalorder %s20, 0
      %p139 = por %p137, %p138
      %p140 = scmp.ne.s32.totalorder %s128, %s129
      %p141 = scmp.eq.s32.totalorder %s21, 7
      %p142 = por %p140, %p141
      %p144 = scmp.ne.s32.totalorder %s129, %s143
      %p145 = scmp.eq.s32.totalorder %s21, 0
      %p146 = por %p144, %p145
      %s147 = ssub.s32 %s22, %s41
      %s148 = ssub.s32 %s23, %s37
      %s149 = sor.u32 %s147, %s148
      %s150 = ssub.s32 %s24, %s33
      %s151 = sor.u32 %s149, %s150
      %p152 = scmp.eq.s32.totalorder %s151, 0
      %s154 = sadd.s32 %s153, 1
      %s155 = scalar_select %p152, %s153, %s154
      %p158 = pneg %p152
      %p159 = scmp.eq.s32.totalorder %s15, 7
      %p160 = por %p158, %p159
      %p161 = scmp.ne.s32.totalorder %s153, %s156
      %p162 = scmp.eq.s32.totalorder %s15, 0
      %p163 = por %p161, %p162
      %p164 = scmp.ne.s32.totalorder %s153, %s156
      %p165 = scmp.eq.s32.totalorder %s20, 7
      %p166 = por %p164, %p165
      %p167 = scmp.ne.s32.totalorder %s156, %s157
      %p168 = scmp.eq.s32.totalorder %s20, 0
      %p169 = por %p167, %p168
      %p170 = scmp.ne.s32.totalorder %s156, %s157
      %p171 = scmp.eq.s32.totalorder %s21, 7
      %p172 = por %p170, %p171
      %p174 = scmp.ne.s32.totalorder %s157, %s173
      %p175 = scmp.eq.s32.totalorder %s21, 0
      %p176 = por %p174, %p175
      %s177 = ssub.s32 %s22, %s41
      %s178 = ssub.s32 %s23, %s37
      %s179 = sor.u32 %s177, %s178
      %s180 = ssub.s32 %s24, %s33
      %s181 = sor.u32 %s179, %s180
      %p182 = scmp.eq.s32.totalorder %s181, 0
      %s184 = sadd.s32 %s183, 1
      %s185 = scalar_select %p182, %s183, %s184
      %p188 = pneg %p182
      %p189 = scmp.eq.s32.totalorder %s15, 7
      %p190 = por %p188, %p189
      %p191 = scmp.ne.s32.totalorder %s183, %s186
      %p192 = scmp.eq.s32.totalorder %s15, 0
      %p193 = por %p191, %p192
      %p194 = scmp.ne.s32.totalorder %s183, %s186
      %p195 = scmp.eq.s32.totalorder %s20, 7
      %p196 = por %p194, %p195
      %p197 = scmp.ne.s32.totalorder %s186, %s187
      %p198 = scmp.eq.s32.totalorder %s20, 0
      %p199 = por %p197, %p198
      %p200 = scmp.ne.s32.totalorder %s186, %s187
      %p201 = scmp.eq.s32.totalorder %s21, 7
      %p202 = por %p200, %p201
      %p204 = scmp.ne.s32.totalorder %s187, %s203
      %p205 = scmp.eq.s32.totalorder %s21, 0
      %p206 = por %p204, %p205
      %p207 = scmp.le.s32.totalorder 1, %s15
      %p208 = scmp.lt.s32.totalorder %s15, 9
      %p209 = pnand %p207, %p208
      %p210 = pneg %p209
      // Predicated region
      $region9: #{_forward.1} parent=5 // pred_check
        _
      $region10: #{_forward.1} parent=5 // pred_check_branch
        %212 = sbr.rel (%p209) target = $region12
      $region11: #{_forward.1} parent=5 // pred_region
        %s213 = ssub.s32 %s15, 1
        // Predicated region
        $region13: #{_forward.1} parent=11 // pred_check
          %p214 = pneg %p55
        $region14: #{_forward.1} parent=11 // pred_check_branch
          %216 = sbr.rel (%p214) target = $region16
        $region15: #{_forward.1} parent=11 // pred_region
          _
        $region16: #{_forward.1} parent=11 // pred_fallthru
          _
        // Predicated region
        $region17: #{_forward.1} parent=11 // pred_check
          %p217 = pneg %p76
        $region18: #{_forward.1} parent=11 // pred_check_branch
          %219 = sbr.rel (%p217) target = $region20
        $region19: #{_forward.1} parent=11 // pred_region
          _
        $region20: #{_forward.1} parent=11 // pred_fallthru
          _
        // Predicated region
        $region21: #{_forward.1} parent=11 // pred_check
          %p220 = pneg %p97
        $region22: #{_forward.1} parent=11 // pred_check_branch
          %222 = sbr.rel (%p220) target = $region24
        $region23: #{_forward.1} parent=11 // pred_region
          _
        $region24: #{_forward.1} parent=11 // pred_fallthru
          _
        // Predicated region
        $region25: #{_forward.1} parent=11 // pred_check
          %p223 = pneg %p118
        $region26: #{_forward.1} parent=11 // pred_check_branch
          %225 = sbr.rel (%p223) target = $region28
        $region27: #{_forward.1} parent=11 // pred_region
          _
        $region28: #{_forward.1} parent=11 // pred_fallthru
          _
        // Predicated region
        $region29: #{_forward.1} parent=11 // pred_check
          %p226 = pneg %p139
        $region30: #{_forward.1} parent=11 // pred_check_branch
          %228 = sbr.rel (%p226) target = $region32
        $region31: #{_forward.1} parent=11 // pred_region
          _
        $region32: #{_forward.1} parent=11 // pred_fallthru
          _
      $region12: #{_forward.1} parent=5 // pred_fallthru
        _
      %p229 = scmp.lt.s32.totalorder %s15, 8
      // Predicated region
      $region33: #{_forward.1} parent=5 // pred_check
        %p230 = pneg %p229
      $region34: #{_forward.1} parent=5 // pred_check_branch
        %232 = sbr.rel (%p230) target = $region36
      $region35: #{_forward.1} parent=5 // pred_region
        // Predicated region
        $region37: #{_forward.1} parent=35 // pred_check
          %p233 = pneg %p163
        $region38: #{_forward.1} parent=35 // pred_check_branch
          %235 = sbr.rel (%p233) target = $region40
        $region39: #{_forward.1} parent=35 // pred_region
          %s236 = sand.u32 %s153, 1
          %s237 = sand.u32 %s153, 1
          %s238 = smul.addr %s237, 48
          %s239 = scalar_lea.vmem [#allocation3], %s238
          %s240 = smul.u32 2, %s23
          %s241 = sadd.s32 %s24, %s240
          %s242 = smul.addr %s22, 24
          %s243 = sadd.s32 %s241, %s242
          %s244 = smul.addr %s243, 8
          %s245 = scalar_lea.vmem %s5, %s244
          // Predicated region
          $region41: #{_forward.1} parent=39 // pred_check
            _
          $region42: #{_forward.1} parent=39 // pred_check_branch
            %247 = sbr.rel (0) target = $region44
          $region43: #{_forward.1} parent=39 // pred_region
            // Predicated region
            $region45: #{_forward.1} parent=43 // pred_check
              _
            $region46: #{_forward.1} parent=43 // pred_check_branch
              %249 = sbr.rel (0) target = $region48
            $region47: #{_forward.1} parent=43 // pred_region
              // Predicated region
              $region60: #{_forward.1} parent=47 // pred_check
                _
              $region61: #{_forward.1} parent=47 // pred_check_branch
                %275 = sbr.rel (0) target = $region63
              $region62: #{_forward.1} parent=47 // pred_region
                loop: start=0, step=1, limit=1
                $region64: #{_forward.1} parent=62 // loop_pre_header
                  _
                $region65: #{_forward.1} parent=62 // loop_header
                  %s277 = sphi 0, %s281
                  %p278 = scmp.ge.s32.totalorder %s277, 1
                  %s282 = sphi %s245, %s245
                  %s283 = sphi %s239, %s239
                $region66: #{_forward.1} parent=62 // loop_header_branch
                  %280 = sbr.rel (%p278) target = $region70
                $region67: #{_forward.1} parent=62 // loop_body
                  %v284 = vld [vmem:[%s282] sm:$0xff]
                  %285 = vst [vmem:[%s283] sm:$0xff] %v284
                  %v286 = vld [vmem:[%s282 + $0x8] sm:$0xff]
                  %287 = vst [vmem:[%s283 + $0x8] sm:$0xff] %v286
                  %v288 = vld [vmem:[%s282 + $0x40] sm:$0xff]
                  %289 = vst [vmem:[%s283 + $0x10] sm:$0xff] %v288
                  %v290 = vld [vmem:[%s282 + $0x48] sm:$0xff]
                  %291 = vst [vmem:[%s283 + $0x18] sm:$0xff] %v290
                  %v292 = vld [vmem:[%s282 + $0x80] sm:$0xff]
                  %293 = vst [vmem:[%s283 + $0x20] sm:$0xff] %v292
                  %v294 = vld [vmem:[%s282 + $0x88] sm:$0xff]
                  %295 = vst [vmem:[%s283 + $0x28] sm:$0xff] %v294
                $region68: #{_forward.1} parent=62 // loop_footer
                  %s281 = sadd.s32 1, %s277
                $region69: #{_forward.1} parent=62 // loop_footer_branch
                  %276 = sbr.rel target = $region65
                $region70: #{_forward.1} parent=62 // loop_exit
                  _
              $region63: #{_forward.1} parent=47 // pred_fallthru
                _
              // Predicated region
              $region71: #{_forward.1} parent=47 // pred_check
                _
              $region72: #{_forward.1} parent=47 // pred_check_branch
                %297 = sbr.rel target = $region74
              $region73: #{_forward.1} parent=47 // pred_region
                _
              $region74: #{_forward.1} parent=47 // pred_fallthru
                _
            $region48: #{_forward.1} parent=43 // pred_fallthru
              _
            // Predicated region
            $region49: #{_forward.1} parent=43 // pred_check
              _
            $region50: #{_forward.1} parent=43 // pred_check_branch
              %251 = sbr.rel target = $region52
            $region51: #{_forward.1} parent=43 // pred_region
              %s253 = ssub.s32 256, 1
              loop: start=0, step=1, limit=1
              $region53: #{_forward.1} parent=51 // loop_pre_header
                _
              $region54: #{_forward.1} parent=51 // loop_header
                %s255 = sphi 0, %s259
                %p256 = scmp.ge.s32.totalorder %s255, 1
                %s260 = sphi %s245, %s245
                %s261 = sphi %s239, %s239
              $region55: #{_forward.1} parent=51 // loop_header_branch
                %258 = sbr.rel (%p256) target = $region59
              $region56: #{_forward.1} parent=51 // loop_body
                %v262 = vld [vmem:[%s260] sm:%s253]
                %263 = vst [vmem:[%s261] sm:%s253] %v262
                %v264 = vld [vmem:[%s260 + $0x8] sm:%s253]
                %265 = vst [vmem:[%s261 + $0x8] sm:%s253] %v264
                %v266 = vld [vmem:[%s260 + $0x40] sm:%s253]
                %267 = vst [vmem:[%s261 + $0x10] sm:%s253] %v266
                %v268 = vld [vmem:[%s260 + $0x48] sm:%s253]
                %269 = vst [vmem:[%s261 + $0x18] sm:%s253] %v268
                %v270 = vld [vmem:[%s260 + $0x80] sm:%s253]
                %271 = vst [vmem:[%s261 + $0x20] sm:%s253] %v270
                %v272 = vld [vmem:[%s260 + $0x88] sm:%s253]
                %273 = vst [vmem:[%s261 + $0x28] sm:%s253] %v272
              $region57: #{_forward.1} parent=51 // loop_footer
                %s259 = sadd.s32 1, %s255
              $region58: #{_forward.1} parent=51 // loop_footer_branch
                %254 = sbr.rel target = $region54
              $region59: #{_forward.1} parent=51 // loop_exit
                _
            $region52: #{_forward.1} parent=43 // pred_fallthru
              _
          $region44: #{_forward.1} parent=39 // pred_fallthru
            _
          %298 = vnop
        $region40: #{_forward.1} parent=35 // pred_fallthru
          _
      $region36: #{_forward.1} parent=5 // pred_fallthru
        _
      %p299 = scmp.le.s32.totalorder 1, %s15
      %p300 = scmp.lt.s32.totalorder %s15, 9
      %p301 = pnand %p299, %p300
      %p302 = pneg %p301
      // Predicated region
      $region75: #{_forward.1} parent=5 // pred_check
        _
      $region76: #{_forward.1} parent=5 // pred_check_branch
        %304 = sbr.rel (%p301) target = $region78
      $region77: #{_forward.1} parent=5 // pred_region
        %s305 = ssub.s32 %s15, 1
        %s306 = sand.u32 %s156, 1
        %s307 = sand.u32 %s156, 1
        %s308 = smul.addr %s307, 48
        %s309 = scalar_lea.vmem [#allocation3], %s308
        // Predicated region
        $region79: #{_forward.1} parent=77 // pred_check
          %p310 = pneg %p169
        $region80: #{_forward.1} parent=77 // pred_check_branch
          %312 = sbr.rel (%p310) target = $region82
        $region81: #{_forward.1} parent=77 // pred_region
          _
        $region82: #{_forward.1} parent=77 // pred_fallthru
          _
        %p313 = pneg %p55
        %p314 = pneg %p52
        %p315 = pneg %p76
        %p316 = pneg %p73
        %p317 = pneg %p97
        %p318 = pneg %p94
        %p319 = pneg %p118
        %p320 = pneg %p115
        %p321 = pneg %p139
        %p322 = pneg %p136
        %s323 = sand.u32 %s156, 1
        %s324 = sand.u32 %s156, 1
        %s325 = smul.addr %s324, 48
        %s326 = scalar_lea.vmem [#allocation3], %s325
        %p327 = pneg %p169
        %p328 = pneg %p166
        %p329 = pneg %p199
        %p330 = pneg %p196
        %s331 = sand.u32 %s186, 1
        %s332 = scalar_lea.sflag [#allocation5], %s331
        %s333 = sand.u32 %s186, 1
        %s334 = smul.addr %s333, 48
        %s335 = scalar_lea.vmem [#allocation4], %s334
        %s336 = smul.u32 2, %s26
        %s337 = smul.u32 2, %s26
        %v339 = vld [vmem:[%s309] sm:$0xff]
        %v340 = vld [vmem:[%s309 + $0x8] sm:$0xff]
        %s341 = scalar_lea.vmem %s309, 16 [#allocation3]
        %v342 = vld [vmem:[%s341] sm:$0xff]
        %v343 = vld [vmem:[%s341 + $0x8] sm:$0xff]
        %s344 = scalar_lea.vmem %s309, 32 [#allocation3]
        %v345 = vld [vmem:[%s344] sm:$0xff]
        %v346 = vld [vmem:[%s344 + $0x8] sm:$0xff]
        %v347 = vmul.f32 %v339, 0.299
        %v348 = vmul.f32 %v340, 0.299
        %v349 = vmul.f32 %v342, 0.587
        %v350 = vmul.f32 %v343, 0.587
        %v351 = vadd.f32 %v347, %v349
        %v352 = vadd.f32 %v348, %v350
        %v353 = vmul.f32 %v345, 0.114
        %v354 = vmul.f32 %v346, 0.114
        %v355 = vadd.f32 %v351, %v353
        %v356 = vadd.f32 %v352, %v354
        %vm357 = vcmask 523264
        %358 = vst.msk [vmem:[#allocation2] sm:$0xff] %vm357, %v355
        %359 = vst.msk [vmem:[#allocation2 + $0x8] sm:$0xff] %vm357, %v356
        %v360 = vmul.f32 %v339, -0.168736
        %v361 = vmul.f32 %v340, -0.168736
        %v362 = vmul.f32 %v342, -0.331264
        %v363 = vmul.f32 %v343, -0.331264
        %v364 = vadd.f32 %v360, %v362
        %v365 = vadd.f32 %v361, %v363
        %v366 = vmul.f32 %v345, 0.5
        %v367 = vmul.f32 %v346, 0.5
        %v368 = vadd.f32 %v364, %v366
        %v369 = vadd.f32 %v365, %v367
        %v370 = vadd.f32 %v368, 128.0
        %v371 = vadd.f32 %v369, 128.0
        %372 = vst.msk [vmem:[#allocation2 + $0x10] sm:$0xff] %vm357, %v370
        %373 = vst.msk [vmem:[#allocation2 + $0x18] sm:$0xff] %vm357, %v371
        %v374 = vmul.f32 %v339, 0.5
        %v375 = vmul.f32 %v340, 0.5
        %v376 = vmul.f32 %v342, -0.418688
        %v377 = vmul.f32 %v343, -0.418688
        %v378 = vadd.f32 %v374, %v376
        %v379 = vadd.f32 %v375, %v377
        %v380 = vmul.f32 %v345, -0.081312
        %v381 = vmul.f32 %v346, -0.081312
        %v382 = vadd.f32 %v378, %v380
        %v383 = vadd.f32 %v379, %v381
        %v384 = vadd.f32 %v382, 128.0
        %v385 = vadd.f32 %v383, 128.0
        %386 = vst.msk [vmem:[#allocation2 + $0x20] sm:$0xff] %vm357, %v384
        %387 = vst.msk [vmem:[#allocation2 + $0x28] sm:$0xff] %vm357, %v385
        %v388 = vld [vmem:[#allocation2] sm:$0xff]
        %v389 = vld [vmem:[#allocation2 + $0x8] sm:$0xff]
        %v390 = vld [vmem:[#allocation2 + $0x10] sm:$0xff]
        %v391 = vld [vmem:[#allocation2 + $0x18] sm:$0xff]
        %v392 = vld [vmem:[#allocation2 + $0x20] sm:$0xff]
        %v393 = vld [vmem:[#allocation2 + $0x28] sm:$0xff]
        %v394 = vpack.c.bf16 %v389, %v388
        %v395 = vpack.c.bf16 %v391, %v390
        %v396 = vpack.c.bf16 %v393, %v392
        %v397 = vld [vmem:[%s2] sm:$0xf]
        %v398 = vld [vmem:[%s2 + $0x4] sm:$0xf]
        %v399 = vld [vmem:[%s2 + $0x8] sm:$0xf]
        %v400 = vld [vmem:[%s2 + $0xc] sm:$0xf]
        %v401 = vld [vmem:[%s2 + $0x10] sm:$0xf]
        %v402 = vld [vmem:[%s2 + $0x14] sm:$0xf]
        %v403 = vld [vmem:[%s2 + $0x18] sm:$0xf]
        %v404 = vld [vmem:[%s2 + $0x1c] sm:$0xf]
        %v413 = vunpack.c.l.b16 %v397
        %v414 = vunpack.c.l.b16 %v398
        %v415 = vunpack.c.l.b16 %v399
        %v416 = vunpack.c.l.b16 %v400
        %v417 = vunpack.c.l.b16 %v401
        %v418 = vunpack.c.l.b16 %v402
        %v419 = vunpack.c.l.b16 %v403
        %v420 = vunpack.c.l.b16 %v404
        %v421 = vpack.c.b16 %v414, %v413
        %v422 = vpack.c.b16 %v416, %v415
        %v423 = vpack.c.b16 %v418, %v417
        %v424 = vpack.c.b16 %v420, %v419
        %v430 = vsel %vm357, %v394, 0
        %v433 = vsel %vm357, %v395, 0
        %v436 = vsel %vm357, %v396, 0
        %438 = vmatpush.bf16.msra.mxu0 0
        %439 = vmatpush.bf16.msra.mxu0 0
        %440 = vmatpush.bf16.msra.mxu0 0
        %441 = vmatpush.bf16.msra.mxu0 0
        %442 = vmatpush.bf16.msra.mxu0 %v424
        %443 = vmatpush.bf16.msra.mxu0 %v423
        %444 = vmatpush.bf16.msra.mxu0 %v422
        %445 = vmatpush.bf16.msra.mxu0 %v421
        %446 = vmatmul.bf16.gmra.mxu0 %v430
        %v447 = vpop.f32.mrf.mxu0
        %v448 = vadd.f32 0.0, %v447
        %v449 = vpop.f32.mrf.mxu0
        %v450 = vadd.f32 0.0, %v449
        %451 = vmatmul.bf16.gmra.mxu0 %v433
        %v452 = vpop.f32.mrf.mxu0
        %v453 = vadd.f32 0.0, %v452
        %v454 = vpop.f32.mrf.mxu0
        %v455 = vadd.f32 0.0, %v454
        %456 = vmatmul.bf16.gmra.mxu0 %v436
        %v457 = vpop.f32.mrf.mxu0
        %v458 = vadd.f32 0.0, %v457
        %v459 = vpop.f32.mrf.mxu0
        %v460 = vadd.f32 0.0, %v459
        %461 = vdwg.mxu0
        %v462 = vld [vmem:[%s0] sm:$0xf]
        %v463 = vld [vmem:[%s0 + $0x4] sm:$0xf]
        %v464 = vpack.c.bf16 %v450, %v448
        %v467 = vunpack.c.l.b16 %v462
        %v468 = vunpack.c.l.b16 %v463
        %v469 = vpack.c.b16 %v468, %v467
        %vm470 = vcmask 130048
        %v472 = vsel %vm470, %v469, 0
        %474 = vmatpush.bf16.msra.mxu0 0
        %475 = vmatpush.bf16.msra.mxu0 0
        %476 = vmatpush.bf16.msra.mxu0 0
        %477 = vmatpush.bf16.msra.mxu0 0
        %478 = vmatpush.bf16.msra.mxu0 0
        %479 = vmatpush.bf16.msra.mxu0 0
        %480 = vmatpush.bf16.msra.mxu0 0
        %481 = vmatpush.bf16.msra.mxu0 %v464
        %482 = vmatmul.bf16.gmra.mxu0 %v472
        %v483 = vpop.f32.mrf.mxu0
        %v484 = vadd.f32 0.0, %v483
        %v485 = vpop.f32.mrf.mxu0
        %v486 = vadd.f32 0.0, %v485
        %487 = vdwg.mxu0
        %v488 = vld [vmem:[%s4] sm:$0xff]
        %v489 = vld [vmem:[%s4 + $0x8] sm:$0xff]
        %s490 = scalar_lea.vmem %s4, 16
        %v491 = vld [vmem:[%s490] sm:$0xff]
        %v492 = vld [vmem:[%s490 + $0x8] sm:$0xff]
        %v493 = vmul.f32 %v484, %v491
        %v494 = vmul.f32 %v486, %v492
        %v495 = vround.ne.pseudo %v493
        %v496 = vround.ne.pseudo %v494
        %v497 = vmul.f32 %v495, %v488
        %v498 = vmul.f32 %v496, %v489
        %499 = vst.msk [vmem:[#allocation2] sm:$0xff] %vm357, %v497
        %500 = vst.msk [vmem:[#allocation2 + $0x8] sm:$0xff] %vm357, %v498
        %v501 = vpack.c.bf16 %v455, %v453
        %502 = vmatpush.bf16.msra.mxu0 0
        %503 = vmatpush.bf16.msra.mxu0 0
        %504 = vmatpush.bf16.msra.mxu0 0
        %505 = vmatpush.bf16.msra.mxu0 0
        %506 = vmatpush.bf16.msra.mxu0 0
        %507 = vmatpush.bf16.msra.mxu0 0
        %508 = vmatpush.bf16.msra.mxu0 0
        %509 = vmatpush.bf16.msra.mxu0 %v501
        %510 = vmatmul.bf16.gmra.mxu0 %v472
        %v511 = vpop.f32.mrf.mxu0
        %v512 = vadd.f32 0.0, %v511
        %v513 = vpop.f32.mrf.mxu0
        %v514 = vadd.f32 0.0, %v513
        %515 = vdwg.mxu0
        %s516 = scalar_lea.vmem %s4, 32
        %v517 = vld [vmem:[%s516] sm:$0xff]
        %v518 = vld [vmem:[%s516 + $0x8] sm:$0xff]
        %s519 = scalar_lea.vmem %s4, 48
        %v520 = vld [vmem:[%s519] sm:$0xff]
        %v521 = vld [vmem:[%s519 + $0x8] sm:$0xff]
        %v522 = vmul.f32 %v512, %v520
        %v523 = vmul.f32 %v514, %v521
        %v524 = vround.ne.pseudo %v522
        %v525 = vround.ne.pseudo %v523
        %v526 = vmul.f32 %v524, %v517
        %v527 = vmul.f32 %v525, %v518
        %528 = vst.msk [vmem:[#allocation2 + $0x10] sm:$0xff] %vm357, %v526
        %529 = vst.msk [vmem:[#allocation2 + $0x18] sm:$0xff] %vm357, %v527
        %v530 = vpack.c.bf16 %v460, %v458
        %531 = vmatpush.bf16.msra.mxu0 0
        %532 = vmatpush.bf16.msra.mxu0 0
        %533 = vmatpush.bf16.msra.mxu0 0
        %534 = vmatpush.bf16.msra.mxu0 0
        %535 = vmatpush.bf16.msra.mxu0 0
        %536 = vmatpush.bf16.msra.mxu0 0
        %537 = vmatpush.bf16.msra.mxu0 0
        %538 = vmatpush.bf16.msra.mxu0 %v530
        %539 = vmatmul.bf16.gmra.mxu0 %v472
        %v540 = vpop.f32.mrf.mxu0
        %v541 = vadd.f32 0.0, %v540
        %v542 = vpop.f32.mrf.mxu0
        %v543 = vadd.f32 0.0, %v542
        %544 = vdwg.mxu0
        %v545 = vld [vmem:[%s516] sm:$0xff]
        %v546 = vld [vmem:[%s516 + $0x8] sm:$0xff]
        %v547 = vld [vmem:[%s519] sm:$0xff]
        %v548 = vld [vmem:[%s519 + $0x8] sm:$0xff]
        %v549 = vmul.f32 %v541, %v547
        %v550 = vmul.f32 %v543, %v548
        %v551 = vround.ne.pseudo %v549
        %v552 = vround.ne.pseudo %v550
        %v553 = vmul.f32 %v551, %v545
        %v554 = vmul.f32 %v552, %v546
        %555 = vst.msk [vmem:[#allocation2 + $0x20] sm:$0xff] %vm357, %v553
        %556 = vst.msk [vmem:[#allocation2 + $0x28] sm:$0xff] %vm357, %v554
        %v557 = vld [vmem:[%s1] sm:$0xf]
        %v558 = vld [vmem:[%s1 + $0x4] sm:$0xf]
        %v559 = vld [vmem:[#allocation2] sm:$0xff]
        %v560 = vld [vmem:[#allocation2 + $0x8] sm:$0xff]
        %v561 = vpack.c.bf16 %v560, %v559
        %v564 = vunpack.c.l.b16 %v557
        %v565 = vunpack.c.l.b16 %v558
        %v566 = vpack.c.b16 %v565, %v564
        %v568 = vsel %vm470, %v566, 0
        %570 = vmatpush.bf16.msra.mxu0 0
        %571 = vmatpush.bf16.msra.mxu0 0
        %572 = vmatpush.bf16.msra.mxu0 0
        %573 = vmatpush.bf16.msra.mxu0 0
        %574 = vmatpush.bf16.msra.mxu0 0
        %575 = vmatpush.bf16.msra.mxu0 0
        %576 = vmatpush.bf16.msra.mxu0 0
        %577 = vmatpush.bf16.msra.mxu0 %v561
        %578 = vmatmul.bf16.gmra.mxu0 %v568
        %v579 = vpop.f32.mrf.mxu0
        %v580 = vadd.f32 0.0, %v579
        %v581 = vpop.f32.mrf.mxu0
        %v582 = vadd.f32 0.0, %v581
        %583 = vdwg.mxu0
        %584 = vst.msk [vmem:[#allocation2] sm:$0xff] %vm357, %v580
        %585 = vst.msk [vmem:[#allocation2 + $0x8] sm:$0xff] %vm357, %v582
        %v586 = vld [vmem:[#allocation2 + $0x10] sm:$0xff]
        %v587 = vld [vmem:[#allocation2 + $0x18] sm:$0xff]
        %v588 = vpack.c.bf16 %v587, %v586
        %589 = vmatpush.bf16.msra.mxu0 0
        %590 = vmatpush.bf16.msra.mxu0 0
        %591 = vmatpush.bf16.msra.mxu0 0
        %592 = vmatpush.bf16.msra.mxu0 0
        %593 = vmatpush.bf16.msra.mxu0 0
        %594 = vmatpush.bf16.msra.mxu0 0
        %595 = vmatpush.bf16.msra.mxu0 0
        %596 = vmatpush.bf16.msra.mxu0 %v588
        %597 = vmatmul.bf16.gmra.mxu0 %v568
        %v598 = vpop.f32.mrf.mxu0
        %v599 = vadd.f32 0.0, %v598
        %v600 = vpop.f32.mrf.mxu0
        %v601 = vadd.f32 0.0, %v600
        %602 = vdwg.mxu0
        %603 = vst.msk [vmem:[#allocation2 + $0x10] sm:$0xff] %vm357, %v599
        %604 = vst.msk [vmem:[#allocation2 + $0x18] sm:$0xff] %vm357, %v601
        %v605 = vld [vmem:[#allocation2 + $0x20] sm:$0xff]
        %v606 = vld [vmem:[#allocation2 + $0x28] sm:$0xff]
        %v607 = vpack.c.bf16 %v606, %v605
        %608 = vmatpush.bf16.msra.mxu0 0
        %609 = vmatpush.bf16.msra.mxu0 0
        %610 = vmatpush.bf16.msra.mxu0 0
        %611 = vmatpush.bf16.msra.mxu0 0
        %612 = vmatpush.bf16.msra.mxu0 0
        %613 = vmatpush.bf16.msra.mxu0 0
        %614 = vmatpush.bf16.msra.mxu0 0
        %615 = vmatpush.bf16.msra.mxu0 %v607
        %616 = vmatmul.bf16.gmra.mxu0 %v568
        %v617 = vpop.f32.mrf.mxu0
        %v618 = vadd.f32 0.0, %v617
        %v619 = vpop.f32.mrf.mxu0
        %v620 = vadd.f32 0.0, %v619
        %621 = vdwg.mxu0
        %622 = vst.msk [vmem:[#allocation2 + $0x20] sm:$0xff] %vm357, %v618
        %623 = vst.msk [vmem:[#allocation2 + $0x28] sm:$0xff] %vm357, %v620
        %v624 = vld [vmem:[#allocation2] sm:$0xff]
        %v625 = vld [vmem:[#allocation2 + $0x8] sm:$0xff]
        %v626 = vld [vmem:[#allocation2 + $0x10] sm:$0xff]
        %v627 = vld [vmem:[#allocation2 + $0x18] sm:$0xff]
        %v628 = vld [vmem:[#allocation2 + $0x20] sm:$0xff]
        %v629 = vld [vmem:[#allocation2 + $0x28] sm:$0xff]
        %v630 = vpack.c.bf16 %v625, %v624
        %v631 = vpack.c.bf16 %v627, %v626
        %v632 = vpack.c.bf16 %v629, %v628
        %v633 = vld [vmem:[%s3] sm:$0xf]
        %v634 = vld [vmem:[%s3 + $0x4] sm:$0xf]
        %v635 = vld [vmem:[%s3 + $0x8] sm:$0xf]
        %v636 = vld [vmem:[%s3 + $0xc] sm:$0xf]
        %v637 = vld [vmem:[%s3 + $0x10] sm:$0xf]
        %v638 = vld [vmem:[%s3 + $0x14] sm:$0xf]
        %v639 = vld [vmem:[%s3 + $0x18] sm:$0xf]
        %v640 = vld [vmem:[%s3 + $0x1c] sm:$0xf]
        %v649 = vunpack.c.l.b16 %v633
        %v650 = vunpack.c.l.b16 %v634
        %v651 = vunpack.c.l.b16 %v635
        %v652 = vunpack.c.l.b16 %v636
        %v653 = vunpack.c.l.b16 %v637
        %v654 = vunpack.c.l.b16 %v638
        %v655 = vunpack.c.l.b16 %v639
        %v656 = vunpack.c.l.b16 %v640
        %v657 = vpack.c.b16 %v650, %v649
        %v658 = vpack.c.b16 %v652, %v651
        %v659 = vpack.c.b16 %v654, %v653
        %v660 = vpack.c.b16 %v656, %v655
        %v666 = vsel %vm357, %v630, 0
        %v669 = vsel %vm357, %v631, 0
        %v672 = vsel %vm357, %v632, 0
        %674 = vmatpush.bf16.msra.mxu0 0
        %675 = vmatpush.bf16.msra.mxu0 0
        %676 = vmatpush.bf16.msra.mxu0 0
        %677 = vmatpush.bf16.msra.mxu0 0
        %678 = vmatpush.bf16.msra.mxu0 %v660
        %679 = vmatpush.bf16.msra.mxu0 %v659
        %680 = vmatpush.bf16.msra.mxu0 %v658
        %681 = vmatpush.bf16.msra.mxu0 %v657
        %682 = vmatmul.bf16.gmra.mxu0 %v666
        %v683 = vpop.f32.mrf.mxu0
        %v684 = vadd.f32 0.0, %v683
        %v685 = vpop.f32.mrf.mxu0
        %v686 = vadd.f32 0.0, %v685
        %687 = vmatmul.bf16.gmra.mxu0 %v669
        %v688 = vpop.f32.mrf.mxu0
        %v689 = vadd.f32 0.0, %v688
        %v690 = vpop.f32.mrf.mxu0
        %v691 = vadd.f32 0.0, %v690
        %692 = vmatmul.bf16.gmra.mxu0 %v672
        %v693 = vpop.f32.mrf.mxu0
        %v694 = vadd.f32 0.0, %v693
        %v695 = vpop.f32.mrf.mxu0
        %v696 = vadd.f32 0.0, %v695
        %697 = vdwg.mxu0
        %v698 = vmul.f32 %v694, 1.402
        %v699 = vmul.f32 %v696, 1.402
        %v700 = vadd.f32 %v684, %v698
        %v701 = vadd.f32 %v686, %v699
        %v702 = vsub.f32 %v700, 179.456
        %v703 = vsub.f32 %v701, 179.456
        %v704 = vmax.f32 %v702, 0.0
        %v705 = vmax.f32 %v703, 0.0
        %v706 = vmin.f32 %v704, 255.0
        %v707 = vmin.f32 %v705, 255.0
        %708 = vst.msk [vmem:[%s335] sm:$0xff] %vm357, %v706
        %709 = vst.msk [vmem:[%s335 + $0x8] sm:$0xff] %vm357, %v707
        %v710 = vmul.f32 %v689, -0.344136
        %v711 = vmul.f32 %v691, -0.344136
        %v712 = vadd.f32 %v684, %v710
        %v713 = vadd.f32 %v686, %v711
        %v714 = vmul.f32 %v694, -0.714136
        %v715 = vmul.f32 %v696, -0.714136
        %v716 = vadd.f32 %v712, %v714
        %v717 = vadd.f32 %v713, %v715
        %v718 = vadd.f32 %v716, 135.45882
        %v719 = vadd.f32 %v717, 135.45882
        %v720 = vmax.f32 %v718, 0.0
        %v721 = vmax.f32 %v719, 0.0
        %v722 = vmin.f32 %v720, 255.0
        %v723 = vmin.f32 %v721, 255.0
        %s724 = scalar_lea.vmem %s335, 16 [#allocation4]
        %725 = vst.msk [vmem:[%s724] sm:$0xff] %vm357, %v722
        %726 = vst.msk [vmem:[%s724 + $0x8] sm:$0xff] %vm357, %v723
        %v727 = vmul.f32 %v689, 1.722
        %v728 = vmul.f32 %v691, 1.722
        %v729 = vadd.f32 %v684, %v727
        %v730 = vadd.f32 %v686, %v728
        %v731 = vsub.f32 %v729, 220.416
        %v732 = vsub.f32 %v730, 220.416
        %v733 = vmax.f32 %v731, 0.0
        %v734 = vmax.f32 %v732, 0.0
        %v735 = vmin.f32 %v733, 255.0
        %v736 = vmin.f32 %v734, 255.0
        %s737 = scalar_lea.vmem %s335, 32 [#allocation4]
        %738 = vst.msk [vmem:[%s737] sm:$0xff] %vm357, %v735
        %739 = vst.msk [vmem:[%s737 + $0x8] sm:$0xff] %vm357, %v736
        %s740 = sand.u32 %s186, 1
        %s741 = scalar_lea.sflag [#allocation5], %s740
        %s742 = sand.u32 %s186, 1
        %s743 = smul.addr %s742, 48
        %s744 = scalar_lea.vmem [#allocation4], %s743
        // Predicated region
        $region83: #{_forward.1} parent=77 // pred_check
          %p745 = pneg %p196
        $region84: #{_forward.1} parent=77 // pred_check_branch
          %747 = sbr.rel (%p745) target = $region86
        $region85: #{_forward.1} parent=77 // pred_region
          #allocation7 [shape = 'u32[6]{0}', space=smem, size = 0x18, scoped, tag = 'DMA stride descriptor']
          %s748 = smul.u32 2, %s26
          %750 = vsyncadd %s741, 0
          %s751 = sadd.s32 %s27, %s748
          %s752 = smul.addr %s25, 24
          %s753 = sadd.s32 %s751, %s752
          %s754 = smul.addr %s753, 8
          %s755 = scalar_lea.hbm %s6, %s754
          %s757 = sshll.u32 1, 14
          %s758 = sxor.u32 4294967295, %s757
          %s761 = sshll.u32 7, 18
          %s762 = sxor.u32 4294967295, %s761
          %s763 = sand.u32 0, %s762
          %s765 = sor.u32 %s763, 0
          %s766 = sshll.u32 %s744, 4
          %s767 = int_to_ptr.vmem [resolvable:$true] %s766
          %s768 = sshll.u32 %s755, 4
          %s769 = int_to_ptr.hbm [resolvable:$true] %s768
          %775 = sst [smem:[#allocation7]] 256
          %s776 = scalar_lea.smem [#allocation7], 1
          %777 = sst [smem:[%s776]] 1024
          %s778 = scalar_lea.smem [#allocation7], 2
          %779 = sst [smem:[%s778]] 2
          %s780 = scalar_lea.smem [#allocation7], 3
          %781 = sst [smem:[%s780]] 128
          %s782 = scalar_lea.smem [#allocation7], 4
          %783 = sst [smem:[%s782]] 128
          %s784 = scalar_lea.smem [#allocation7], 5
          %785 = sst [smem:[%s784]] 8
          %787 = dma.general %s767, 768, %s769, %s741, [#allocation6], [#allocation7], %s765, 0
        $region86: #{_forward.1} parent=77 // pred_fallthru
          _
      $region78: #{_forward.1} parent=5 // pred_fallthru
        _
      %p788 = scmp.le.s32.totalorder 2, %s15
      // Predicated region
      $region87: #{_forward.1} parent=5 // pred_check
        %p789 = pneg %p788
      $region88: #{_forward.1} parent=5 // pred_check_branch
        %791 = sbr.rel (%p789) target = $region90
      $region89: #{_forward.1} parent=5 // pred_region
        %s792 = ssub.s32 %s15, 2
        // Predicated region
        $region91: #{_forward.1} parent=89 // pred_check
          %p793 = pneg %p202
        $region92: #{_forward.1} parent=89 // pred_check_branch
          %795 = sbr.rel (%p793) target = $region94
        $region93: #{_forward.1} parent=89 // pred_region
          %s796 = sand.u32 %s187, 1
          %s797 = scalar_lea.sflag [#allocation5], %s796
          %s798 = sand.u32 %s187, 1
          %s799 = smul.addr %s798, 48
          %s800 = scalar_lea.vmem [#allocation4], %s799
          %802 = dma.done %s797, 768
        $region94: #{_forward.1} parent=89 // pred_fallthru
          _
      $region90: #{_forward.1} parent=5 // pred_fallthru
        _
    $region6: #{_forward.1} parent=1 // loop_footer
      %s19 = sadd.s32 1, %s15
    $region7: #{_forward.1} parent=1 // loop_footer_branch
      %14 = sbr.rel target = $region3
    $region8: #{_forward.1} parent=1 // loop_exit
      _
    %803 = vsyncpa [#allocation5], 1
    %s804 = scalar_lea.sflag [#allocation5], 1
    %805 = vsyncpa %s804, 1

</llo_original>
